<compile_context>
chip_gen: v5e
topology: v5e:2x2
jax: 0.10.0
libtpu: 0.0.40
codegen_flags: <defaults>
</compile_context>

<pallas_src>
import functools

import jax
import jax.numpy as jnp
from jax.experimental import pallas as pl
from jax.experimental.pallas import tpu as pltpu


def _strip_pooling_kernel(x_ref, w1_ref, b1_ref, wt13_ref, b2_ref,
                          wt31_ref, b3_ref, w2_ref, b4_ref, o_ref,
                          *, H, W, Nb):
    f32, bf16 = jnp.float32, jnp.bfloat16
    HW = H * W
    Cin = x_ref.shape[-1]
    Cmp = w1_ref.shape[-1]

    # conv1: 1x1 conv (BN scale folded into w1) == one bf16 MXU matmul over the
    # whole Nb-image block, + bias + relu.
    x = x_ref[...].reshape(Nb * HW, Cin)                    # (Nb*HW, Cin) bf16
    t = jnp.dot(x, w1_ref[...], preferred_element_type=f32)
    t = jnp.maximum(t + b1_ref[...], 0.0)                   # (Nb*HW, Cmp) f32

    # Per-image strip average pools: reshape + mean reductions (no MXU work).
    # Nb is small and static, so the Python loop unrolls cheaply.
    x1s, x2s = [], []
    for n in range(Nb):
        tn = t[n * HW:(n + 1) * HW].reshape(H, W, Cmp)
        x1s.append(jnp.mean(tn, axis=0))                    # pool over H -> (W, Cmp)
        x2s.append(jnp.mean(tn, axis=1))                    # pool over W -> (H, Cmp)
    x1 = jnp.concatenate(x1s, axis=0) if Nb > 1 else x1s[0]  # (Nb*W, Cmp) f32
    x2 = jnp.concatenate(x2s, axis=0) if Nb > 1 else x2s[0]  # (Nb*H, Cmp) f32

    # (1,3)/(3,1) convs with padding 1 on the pooled strips: the z[l-1]/z[l+1]
    # neighbours come from XLU rolls (boundary rows zeroed with an iota mask,
    # which also isolates batch images in the flattened strip), and the three
    # taps are fused into a single K=3*Cmp bf16 matmul (taps concatenated in
    # the wrapper).
    def conv3(z, taps_ref, L):
        R = z.shape[0]
        pos = jax.lax.broadcasted_iota(jnp.int32, (R, 1), 0) % L
        prev = jnp.where(pos == 0, 0.0, pltpu.roll(z, shift=1, axis=0))      # z[l-1]
        nxt = jnp.where(pos == L - 1, 0.0, pltpu.roll(z, shift=R - 1, axis=0))  # z[l+1]
        zcat = jnp.concatenate([prev, z, nxt], axis=-1).astype(bf16)         # (R, 3*Cmp)
        return jnp.dot(zcat, taps_ref[...], preferred_element_type=f32)

    y1 = conv3(x1, wt13_ref, W) + b2_ref[...]               # (Nb*W, Cmp) f32
    y2 = conv3(x2, wt31_ref, H) + b3_ref[...]               # (Nb*H, Cmp) f32

    # align_corners=True bilinear upsample of 1-row / 1-col strips is an exact
    # broadcast: fuse sum + relu and materialize u directly in bf16.
    us = []
    for n in range(Nb):
        y1n = y1[n * W:(n + 1) * W]                          # (W, Cmp)
        y2n = y2[n * H:(n + 1) * H]                          # (H, Cmp)
        un = jnp.maximum(y1n[None, :, :] + y2n[:, None, :], 0.0)   # (H, W, Cmp)
        us.append(un.astype(bf16).reshape(HW, Cmp))
    u = jnp.concatenate(us, axis=0) if Nb > 1 else us[0]     # (Nb*HW, Cmp) bf16

    # conv2: 1x1 conv (BN scale folded into w2) == one bf16 MXU matmul + bias +
    # relu; lane-dense (Coutp % 128 == 0) unmasked store.
    o = jnp.dot(u, w2_ref[...], preferred_element_type=f32)
    o = jnp.maximum(o + b4_ref[...], 0.0)
    o_ref[...] = o.reshape(Nb, HW, o_ref.shape[-1]).astype(o_ref.dtype)


def _round_up(n, m):
    return ((n + m - 1) // m) * m


def _pad_to(a, shape):
    return jnp.pad(a, [(0, s - d) for d, s in zip(a.shape, shape)])


def _fuse_taps(taps, scale, Cmp):
    """(3, Cm, Cm) taps -> (3*Cmp, Cmp) bf16 with the BN output scale folded,
    so conv1_3 / conv3_1 become one matmul on concat([z[l-1], z[l], z[l+1]])."""
    t = taps * scale[None]                                   # scale over out-channels
    t = _pad_to(t, (3, Cmp, Cmp))
    return t.reshape(3 * Cmp, Cmp).astype(jnp.bfloat16)


def _vmem_capacity_bytes():
    try:
        info = pltpu.get_tpu_info()
        for attr in ("vmem_capacity_bytes", "vmem_size_bytes", "vmem_bytes"):
            v = getattr(info, attr, None)
            if v:
                return int(v)
    except Exception:
        pass
    return 64 * 1024 * 1024        # conservative default (v7x per-TC VMEM)


def _pick_nb(N, HW, per_img_bytes, w_bytes, vmem_cap, target_rows):
    """Largest batch block that (a) divides N, (b) keeps ~target_rows MXU rows,
    and (c) keeps the double-buffered block within roughly half of VMEM."""
    budget = max(vmem_cap // 2 - w_bytes, per_img_bytes)
    nb = max(1, min(N, max(1, target_rows // max(HW, 1)),
                    max(1, budget // max(per_img_bytes, 1))))
    while N % nb:
        nb -= 1
    return max(nb, 1)


def strip_pooling_pallas_nhwc(x_nhwc, params, *, target_block_rows=4096):
    """NHWC-in / NHWC-out entry point (no layout transposes)."""
    N, H, W, Cin = x_nhwc.shape
    Cm = params["w1"].shape[1]
    Cout = params["w2"].shape[1]
    Cmp = _round_up(Cm, 128)
    Coutp = _round_up(Cout, 128)
    HW = H * W
    f32, bf16 = jnp.float32, jnp.bfloat16

    # bf16 padded writeback when Cout is heavily lane-padded (dominant HBM
    # stream halves); keep f32 when Cout already fills the 128 lanes.
    out_dtype = bf16 if Coutp != Cout else f32
    out_isz = jnp.dtype(out_dtype).itemsize

    # Fold eval-mode BN scales into the conv weights, pad channel dims to 128
    # lanes, cast matmul weights to bf16 (accumulation stays f32 in-kernel).
    w1 = _pad_to(params["w1"] * params["s1"], (Cin, Cmp)).astype(bf16)
    b1 = _pad_to(params["b1"], (1, Cmp)).astype(f32)
    wt13 = _fuse_taps(params["w13"], params["s2"], Cmp)
    b2 = _pad_to(params["b2"], (1, Cmp)).astype(f32)
    wt31 = _fuse_taps(params["w31"], params["s3"], Cmp)
    b3 = _pad_to(params["b3"], (1, Cmp)).astype(f32)
    w2 = _pad_to(params["w2"] * params["s4"], (Cmp, Coutp)).astype(bf16)
    b4 = _pad_to(params["b4"], (1, Coutp)).astype(f32)
    weight_args = [w1, b1, wt13, b2, wt31, b3, w2, b4]

    # Rough per-image VMEM footprint: double-buffered bf16 input + double-
    # buffered padded output + live intermediates (t f32, u bf16).
    per_img = HW * (2 * Cin * 2 + 2 * Coutp * out_isz + Cmp * (4 + 2))
    w_bytes = sum(int(a.size) * a.dtype.itemsize for a in weight_args)
    vmem_cap = _vmem_capacity_bytes()

    Nb = _pick_nb(N, HW, per_img, w_bytes, vmem_cap, target_block_rows)
    vmem_limit = int(min(vmem_cap - 4 * 1024 * 1024,
                         max(Nb * per_img + w_bytes + (8 << 20), 32 << 20)))

    x_flat = x_nhwc.reshape(N, HW, Cin).astype(bf16)   # bf16 halves input HBM traffic

    def full_spec(arr):
        nd = arr.ndim
        return pl.BlockSpec(arr.shape, lambda b, _nd=nd: (0,) * _nd)

    out_flat = pl.pallas_call(
        functools.partial(_strip_pooling_kernel, H=H, W=W, Nb=Nb),
        out_shape=jax.ShapeDtypeStruct((N, HW, Coutp), out_dtype),
        grid_spec=pltpu.PrefetchScalarGridSpec(
            num_scalar_prefetch=0,
            grid=(N // Nb,),
            in_specs=[pl.BlockSpec((Nb, HW, Cin), lambda b: (b, 0, 0))]
                     + [full_spec(a) for a in weight_args],
            out_specs=pl.BlockSpec((Nb, HW, Coutp), lambda b: (b, 0, 0)),
        ),
        compiler_params=pltpu.CompilerParams(
            dimension_semantics=("parallel",),           # batch-block axis
            vmem_limit_bytes=vmem_limit,
        ),
    )(x_flat, *weight_args)

    return out_flat[:, :, :Cout].astype(f32).reshape(N, H, W, Cout)


def strip_pooling_pallas(x_nchw, params):
    """NCHW (PyTorch-layout) wrapper around the NHWC entry point."""
    x_nhwc = jnp.transpose(x_nchw, (0, 2, 3, 1))
    out = strip_pooling_pallas_nhwc(x_nhwc, params)
    return jnp.transpose(out, (0, 3, 1, 2))


def init_params(key, in_channels, out_channels):
    inter = in_channels // 4
    eps = 1e-5
    ks = jax.random.split(key, 8)

    def bn_fold(k, c):
        k1, k2, k3, k4 = jax.random.split(k, 4)
        gamma = 1.0 + 0.1 * jax.random.normal(k1, (c,), jnp.float32)
        beta = 0.1 * jax.random.normal(k2, (c,), jnp.float32)
        mean = 0.1 * jax.random.normal(k3, (c,), jnp.float32)
        var = jax.random.uniform(k4, (c,), jnp.float32, 0.5, 1.5)
        s = gamma * jax.lax.rsqrt(var + eps)
        b = beta - mean * s
        return s.reshape(1, c), b.reshape(1, c)

    # conv weights stored as (Cin, Cout) [1x1 convs] and (3, Cin, Cout) taps;
    # taps[k][ci, co] == torch_weight[co, ci, 0, k] (resp. [co, ci, k, 0]).
    w1 = 0.2 * jax.random.normal(ks[0], (in_channels, inter), jnp.float32)
    s1, b1 = bn_fold(ks[1], inter)
    w13 = 0.2 * jax.random.normal(ks[2], (3, inter, inter), jnp.float32)
    s2, b2 = bn_fold(ks[3], inter)
    w31 = 0.2 * jax.random.normal(ks[4], (3, inter, inter), jnp.float32)
    s3, b3 = bn_fold(ks[5], inter)
    w2 = 0.2 * jax.random.normal(ks[6], (inter, out_channels), jnp.float32)
    s4, b4 = bn_fold(ks[7], out_channels)
    return dict(w1=w1, s1=s1, b1=b1, w13=w13, s2=s2, b2=b2,
                w31=w31, s3=s3, b3=b3, w2=w2, s4=s4, b4=b4)


def strip_pooling_ref(x_nchw, p):
    """Pure-JAX f32 reference mirroring the PyTorch forward (eval-mode BN)."""
    hi = jax.lax.Precision.HIGHEST
    x = jnp.transpose(x_nchw, (0, 2, 3, 1))                      # NHWC
    t = jnp.einsum('nhwc,cd->nhwd', x, p["w1"], precision=hi)
    t = jax.nn.relu(t * p["s1"] + p["b1"])
    x1 = jnp.mean(t, axis=1)                                     # (N, W, Cm)
    x2 = jnp.mean(t, axis=2)                                     # (N, H, Cm)

    def conv3(z, taps):                                          # z: (N, L, C)
        zp = jnp.pad(z, ((0, 0), (1, 1), (0, 0)))
        return (jnp.einsum('nlc,cd->nld', zp[:, :-2], taps[0], precision=hi)
                + jnp.einsum('nlc,cd->nld', zp[:, 1:-1], taps[1], precision=hi)
                + jnp.einsum('nlc,cd->nld', zp[:, 2:], taps[2], precision=hi))

    y1 = conv3(x1, p["w13"]) * p["s2"] + p["b2"]                 # (N, W, Cm)
    y2 = conv3(x2, p["w31"]) * p["s3"] + p["b3"]                 # (N, H, Cm)
    # align_corners=True bilinear upsample of a 1-row / 1-col strip == broadcast
    u = jax.nn.relu(y1[:, None, :, :] + y2[:, :, None, :])       # (N, H, W, Cm)
    o = jnp.einsum('nhwc,cd->nhwd', u, p["w2"], precision=hi)
    o = jax.nn.relu(o * p["s4"] + p["b4"])
    return jnp.transpose(o, (0, 3, 1, 2))                        # NCHW


if __name__ == "__main__":
    key = jax.random.PRNGKey(0)
    kx, kp = jax.random.split(key)
    N, Cin, H, W = 2, 16, 16, 16
    Cout = 16
    x = jax.random.normal(kx, (N, Cin, H, W), jnp.float32)       # NCHW like torch
    params = init_params(kp, Cin, Cout)

    out = jax.block_until_ready(strip_pooling_pallas(x, params))
    ref = jax.block_until_ready(strip_pooling_ref(x, params))

    assert out.shape == (N, Cout, H, W), out.shape
    # Tolerance accounts for bf16 inputs/weights/taps, the bf16 `u`
    # intermediate and the bf16 padded writeback (all with f32 accumulation);
    # the reference is full f32.  A structural bug (wrong neighbour shift, BN
    # fold, upsample) would show errors >10x this bound.
    max_err = float(jnp.max(jnp.abs(out - ref)))
    assert jnp.allclose(out, ref, rtol=3e-2, atol=3e-2), max_err
    print("KERNEL_OK")
</pallas_src>

<mosaic_0001>
module attributes {stable_mosaic.version = 11 : i64} {
  func.func @_strip_pooling_kernel(%arg0: i32, %arg1: memref<2x256x16xbf16, #tpu.memory_space<vmem>>, %arg2: memref<16x128xbf16, #tpu.memory_space<vmem>>, %arg3: memref<1x128xf32, #tpu.memory_space<vmem>>, %arg4: memref<384x128xbf16, #tpu.memory_space<vmem>>, %arg5: memref<1x128xf32, #tpu.memory_space<vmem>>, %arg6: memref<384x128xbf16, #tpu.memory_space<vmem>>, %arg7: memref<1x128xf32, #tpu.memory_space<vmem>>, %arg8: memref<128x128xbf16, #tpu.memory_space<vmem>>, %arg9: memref<1x128xf32, #tpu.memory_space<vmem>>, %arg10: memref<2x256x128xbf16, #tpu.memory_space<vmem>>) attributes {dimension_semantics = [#tpu.dimension_semantics<parallel>], iteration_bounds = array<i64: 1>, scalar_prefetch = 0 : i64, scratch_operands = 0 : i64, tpu.core_type = #tpu.core_type<tc>, window_params = [{transform_indices = @transform_0, window_bounds = array<i64: 2, 256, 16>}, {pipeline_mode = #tpu.pipeline_mode<synchronous>, transform_indices = @transform_1, window_bounds = array<i64: 16, 128>}, {pipeline_mode = #tpu.pipeline_mode<synchronous>, transform_indices = @transform_2, window_bounds = array<i64: 1, 128>}, {pipeline_mode = #tpu.pipeline_mode<synchronous>, transform_indices = @transform_3, window_bounds = array<i64: 384, 128>}, {pipeline_mode = #tpu.pipeline_mode<synchronous>, transform_indices = @transform_4, window_bounds = array<i64: 1, 128>}, {pipeline_mode = #tpu.pipeline_mode<synchronous>, transform_indices = @transform_5, window_bounds = array<i64: 384, 128>}, {pipeline_mode = #tpu.pipeline_mode<synchronous>, transform_indices = @transform_6, window_bounds = array<i64: 1, 128>}, {pipeline_mode = #tpu.pipeline_mode<synchronous>, transform_indices = @transform_7, window_bounds = array<i64: 128, 128>}, {pipeline_mode = #tpu.pipeline_mode<synchronous>, transform_indices = @transform_8, window_bounds = array<i64: 1, 128>}, {transform_indices = @transform_9, window_bounds = array<i64: 2, 256, 128>}]} {
    %c0 = arith.constant 0 : index
    %c0_0 = arith.constant 0 : index
    %c0_1 = arith.constant 0 : index
    %0 = vector.load %arg1[%c0, %c0_0, %c0_1] : memref<2x256x16xbf16, #tpu.memory_space<vmem>>, vector<2x256x16xbf16>
    %1 = vector.shape_cast %0 : vector<2x256x16xbf16> to vector<512x16xbf16>
    %c0_2 = arith.constant 0 : index
    %c0_3 = arith.constant 0 : index
    %2 = vector.load %arg2[%c0_2, %c0_3] : memref<16x128xbf16, #tpu.memory_space<vmem>>, vector<16x128xbf16>
    %cst = arith.constant dense<0.000000e+00> : vector<512x128xf32>
    %3 = tpu.matmul %1, %2, %cst {dimension_numbers = #tpu.dot_dimension_numbers<[1], [0], [0], [1], [0, 0, 1, 1], [], []>} : vector<512x16xbf16>, vector<16x128xbf16>, vector<512x128xf32> -> vector<512x128xf32>
    %c0_4 = arith.constant 0 : index
    %c0_5 = arith.constant 0 : index
    %4 = vector.load %arg3[%c0_4, %c0_5] : memref<1x128xf32, #tpu.memory_space<vmem>>, vector<1x128xf32>
    %5 = vector.broadcast %4 : vector<1x128xf32> to vector<512x128xf32>
    %6 = arith.addf %3, %5 : vector<512x128xf32>
    %cst_6 = arith.constant 0.000000e+00 : f32
    %7 = vector.broadcast %cst_6 : f32 to vector<512x128xf32>
    %8 = arith.maximumf %6, %7 : vector<512x128xf32>
    %9 = vector.extract_strided_slice %8 {offsets = [0, 0], sizes = [256, 128], strides = [1, 1]} : vector<512x128xf32> to vector<256x128xf32>
    %10 = vector.shape_cast %9 : vector<256x128xf32> to vector<16x16x128xf32>
    %cst_7 = arith.constant dense<0.000000e+00> : vector<16x128xf32>
    %11 = vector.multi_reduction <add>, %10, %cst_7 [0] : vector<16x16x128xf32> to vector<16x128xf32>
    %cst_8 = arith.constant 1.600000e+01 : f32
    %12 = vector.broadcast %cst_8 : f32 to vector<16x128xf32>
    %13 = arith.divf %11, %12 : vector<16x128xf32>
    %cst_9 = arith.constant dense<0.000000e+00> : vector<16x128xf32>
    %14 = vector.multi_reduction <add>, %10, %cst_9 [1] : vector<16x16x128xf32> to vector<16x128xf32>
    %cst_10 = arith.constant 1.600000e+01 : f32
    %15 = vector.broadcast %cst_10 : f32 to vector<16x128xf32>
    %16 = arith.divf %14, %15 : vector<16x128xf32>
    %17 = vector.extract_strided_slice %8 {offsets = [256, 0], sizes = [256, 128], strides = [1, 1]} : vector<512x128xf32> to vector<256x128xf32>
    %18 = vector.shape_cast %17 : vector<256x128xf32> to vector<16x16x128xf32>
    %cst_11 = arith.constant dense<0.000000e+00> : vector<16x128xf32>
    %19 = vector.multi_reduction <add>, %18, %cst_11 [0] : vector<16x16x128xf32> to vector<16x128xf32>
    %cst_12 = arith.constant 1.600000e+01 : f32
    %20 = vector.broadcast %cst_12 : f32 to vector<16x128xf32>
    %21 = arith.divf %19, %20 : vector<16x128xf32>
    %cst_13 = arith.constant dense<0.000000e+00> : vector<16x128xf32>
    %22 = vector.multi_reduction <add>, %18, %cst_13 [1] : vector<16x16x128xf32> to vector<16x128xf32>
    %cst_14 = arith.constant 1.600000e+01 : f32
    %23 = vector.broadcast %cst_14 : f32 to vector<16x128xf32>
    %24 = arith.divf %22, %23 : vector<16x128xf32>
    %25 = tpu.concatenate %13, %21 in 0 : vector<16x128xf32>, vector<16x128xf32> -> vector<32x128xf32>
    %26 = tpu.concatenate %16, %24 in 0 : vector<16x128xf32>, vector<16x128xf32> -> vector<32x128xf32>
    %27 = tpu.iota {dimensions = array<i32: 0>} : vector<32x1xi32>
    %c16_i32 = arith.constant 16 : i32
    %c0_i32 = arith.constant 0 : i32
    %28 = arith.cmpi eq, %c16_i32, %c0_i32 : i32
    %c1_i32 = arith.constant 1 : i32
    %29 = arith.select %28, %c1_i32, %c16_i32 : i32
    %30 = vector.broadcast %29 : i32 to vector<32x1xi32>
    %31 = arith.remsi %27, %30 : vector<32x1xi32>
    %c0_i32_15 = arith.constant 0 : i32
    %32 = vector.broadcast %c0_i32_15 : i32 to vector<32x1xi32>
    %33 = arith.cmpi ne, %31, %32 : vector<32x1xi32>
    %c0_i32_16 = arith.constant 0 : i32
    %34 = vector.broadcast %c0_i32_16 : i32 to vector<32x1xi32>
    %35 = arith.cmpi slt, %31, %34 : vector<32x1xi32>
    %c0_i32_17 = arith.constant 0 : i32
    %36 = arith.cmpi slt, %29, %c0_i32_17 : i32
    %37 = vector.broadcast %36 : i1 to vector<32x1xi1>
    %38 = vector.broadcast %37 : vector<32x1xi1> to vector<32x1xi1>
    %39 = arith.xori %35, %38 : vector<32x1xi1>
    %40 = arith.andi %39, %33 : vector<32x1xi1>
    %41 = vector.broadcast %29 : i32 to vector<32x1xi32>
    %42 = arith.addi %31, %41 : vector<32x1xi32>
    %43 = arith.select %40, %42, %31 : vector<32x1xi1>, vector<32x1xi32>
    %c0_i32_18 = arith.constant 0 : i32
    %44 = vector.broadcast %c0_i32_18 : i32 to vector<32x1xi32>
    %45 = arith.cmpi eq, %43, %44 : vector<32x1xi32>
    %c1_i32_19 = arith.constant 1 : i32
    %46 = tpu.dynamic_rotate %25 by %c1_i32_19 dim 0 : vector<32x128xf32>, i32 -> vector<32x128xf32>
    %cst_20 = arith.constant 0.000000e+00 : f32
    %47 = vector.shape_cast %45 : vector<32x1xi1> to vector<32x1xi1>
    %48 = vector.broadcast %47 : vector<32x1xi1> to vector<32x128xi1>
    %49 = vector.broadcast %cst_20 : f32 to vector<32x128xf32>
    %50 = arith.select %48, %49, %46 : vector<32x128xi1>, vector<32x128xf32>
    %c15_i32 = arith.constant 15 : i32
    %51 = vector.broadcast %c15_i32 : i32 to vector<32x1xi32>
    %52 = arith.cmpi eq, %43, %51 : vector<32x1xi32>
    %c31_i32 = arith.constant 31 : i32
    %53 = tpu.dynamic_rotate %25 by %c31_i32 dim 0 : vector<32x128xf32>, i32 -> vector<32x128xf32>
    %cst_21 = arith.constant 0.000000e+00 : f32
    %54 = vector.shape_cast %52 : vector<32x1xi1> to vector<32x1xi1>
    %55 = vector.broadcast %54 : vector<32x1xi1> to vector<32x128xi1>
    %56 = vector.broadcast %cst_21 : f32 to vector<32x128xf32>
    %57 = arith.select %55, %56, %53 : vector<32x128xi1>, vector<32x128xf32>
    %58 = tpu.concatenate %50, %25, %57 in 1 : vector<32x128xf32>, vector<32x128xf32>, vector<32x128xf32> -> vector<32x384xf32>
    %59 = arith.truncf %58 : vector<32x384xf32> to vector<32x384xbf16>
    %c0_22 = arith.constant 0 : index
    %c0_23 = arith.constant 0 : index
    %60 = vector.load %arg4[%c0_22, %c0_23] : memref<384x128xbf16, #tpu.memory_space<vmem>>, vector<384x128xbf16>
    %cst_24 = arith.constant dense<0.000000e+00> : vector<32x128xf32>
    %61 = tpu.matmul %59, %60, %cst_24 {dimension_numbers = #tpu.dot_dimension_numbers<[1], [0], [0], [1], [0, 0, 1, 1], [], []>} : vector<32x384xbf16>, vector<384x128xbf16>, vector<32x128xf32> -> vector<32x128xf32>
    %c0_25 = arith.constant 0 : index
    %c0_26 = arith.constant 0 : index
    %62 = vector.load %arg5[%c0_25, %c0_26] : memref<1x128xf32, #tpu.memory_space<vmem>>, vector<1x128xf32>
    %63 = vector.broadcast %62 : vector<1x128xf32> to vector<32x128xf32>
    %64 = arith.addf %61, %63 : vector<32x128xf32>
    %65 = tpu.iota {dimensions = array<i32: 0>} : vector<32x1xi32>
    %c16_i32_27 = arith.constant 16 : i32
    %c0_i32_28 = arith.constant 0 : i32
    %66 = arith.cmpi eq, %c16_i32_27, %c0_i32_28 : i32
    %c1_i32_29 = arith.constant 1 : i32
    %67 = arith.select %66, %c1_i32_29, %c16_i32_27 : i32
    %68 = vector.broadcast %67 : i32 to vector<32x1xi32>
    %69 = arith.remsi %65, %68 : vector<32x1xi32>
    %c0_i32_30 = arith.constant 0 : i32
    %70 = vector.broadcast %c0_i32_30 : i32 to vector<32x1xi32>
    %71 = arith.cmpi ne, %69, %70 : vector<32x1xi32>
    %c0_i32_31 = arith.constant 0 : i32
    %72 = vector.broadcast %c0_i32_31 : i32 to vector<32x1xi32>
    %73 = arith.cmpi slt, %69, %72 : vector<32x1xi32>
    %c0_i32_32 = arith.constant 0 : i32
    %74 = arith.cmpi slt, %67, %c0_i32_32 : i32
    %75 = vector.broadcast %74 : i1 to vector<32x1xi1>
    %76 = vector.broadcast %75 : vector<32x1xi1> to vector<32x1xi1>
    %77 = arith.xori %73, %76 : vector<32x1xi1>
    %78 = arith.andi %77, %71 : vector<32x1xi1>
    %79 = vector.broadcast %67 : i32 to vector<32x1xi32>
    %80 = arith.addi %69, %79 : vector<32x1xi32>
    %81 = arith.select %78, %80, %69 : vector<32x1xi1>, vector<32x1xi32>
    %c0_i32_33 = arith.constant 0 : i32
    %82 = vector.broadcast %c0_i32_33 : i32 to vector<32x1xi32>
    %83 = arith.cmpi eq, %81, %82 : vector<32x1xi32>
    %c1_i32_34 = arith.constant 1 : i32
    %84 = tpu.dynamic_rotate %26 by %c1_i32_34 dim 0 : vector<32x128xf32>, i32 -> vector<32x128xf32>
    %cst_35 = arith.constant 0.000000e+00 : f32
    %85 = vector.shape_cast %83 : vector<32x1xi1> to vector<32x1xi1>
    %86 = vector.broadcast %85 : vector<32x1xi1> to vector<32x128xi1>
    %87 = vector.broadcast %cst_35 : f32 to vector<32x128xf32>
    %88 = arith.select %86, %87, %84 : vector<32x128xi1>, vector<32x128xf32>
    %c15_i32_36 = arith.constant 15 : i32
    %89 = vector.broadcast %c15_i32_36 : i32 to vector<32x1xi32>
    %90 = arith.cmpi eq, %81, %89 : vector<32x1xi32>
    %c31_i32_37 = arith.constant 31 : i32
    %91 = tpu.dynamic_rotate %26 by %c31_i32_37 dim 0 : vector<32x128xf32>, i32 -> vector<32x128xf32>
    %cst_38 = arith.constant 0.000000e+00 : f32
    %92 = vector.shape_cast %90 : vector<32x1xi1> to vector<32x1xi1>
    %93 = vector.broadcast %92 : vector<32x1xi1> to vector<32x128xi1>
    %94 = vector.broadcast %cst_38 : f32 to vector<32x128xf32>
    %95 = arith.select %93, %94, %91 : vector<32x128xi1>, vector<32x128xf32>
    %96 = tpu.concatenate %88, %26, %95 in 1 : vector<32x128xf32>, vector<32x128xf32>, vector<32x128xf32> -> vector<32x384xf32>
    %97 = arith.truncf %96 : vector<32x384xf32> to vector<32x384xbf16>
    %c0_39 = arith.constant 0 : index
    %c0_40 = arith.constant 0 : index
    %98 = vector.load %arg6[%c0_39, %c0_40] : memref<384x128xbf16, #tpu.memory_space<vmem>>, vector<384x128xbf16>
    %cst_41 = arith.constant dense<0.000000e+00> : vector<32x128xf32>
    %99 = tpu.matmul %97, %98, %cst_41 {dimension_numbers = #tpu.dot_dimension_numbers<[1], [0], [0], [1], [0, 0, 1, 1], [], []>} : vector<32x384xbf16>, vector<384x128xbf16>, vector<32x128xf32> -> vector<32x128xf32>
    %c0_42 = arith.constant 0 : index
    %c0_43 = arith.constant 0 : index
    %100 = vector.load %arg7[%c0_42, %c0_43] : memref<1x128xf32, #tpu.memory_space<vmem>>, vector<1x128xf32>
    %101 = vector.broadcast %100 : vector<1x128xf32> to vector<32x128xf32>
    %102 = arith.addf %99, %101 : vector<32x128xf32>
    %103 = vector.extract_strided_slice %64 {offsets = [0, 0], sizes = [16, 128], strides = [1, 1]} : vector<32x128xf32> to vector<16x128xf32>
    %104 = vector.extract_strided_slice %102 {offsets = [0, 0], sizes = [16, 128], strides = [1, 1]} : vector<32x128xf32> to vector<16x128xf32>
    %105 = vector.shape_cast %103 : vector<16x128xf32> to vector<1x16x128xf32>
    %106 = vector.shape_cast %104 : vector<16x128xf32> to vector<16x1x128xf32>
    %107 = vector.broadcast %105 : vector<1x16x128xf32> to vector<16x16x128xf32>
    %108 = vector.broadcast %106 : vector<16x1x128xf32> to vector<16x16x128xf32>
    %109 = arith.addf %107, %108 : vector<16x16x128xf32>
    %cst_44 = arith.constant 0.000000e+00 : f32
    %110 = vector.broadcast %cst_44 : f32 to vector<16x16x128xf32>
    %111 = arith.maximumf %109, %110 : vector<16x16x128xf32>
    %112 = arith.truncf %111 : vector<16x16x128xf32> to vector<16x16x128xbf16>
    %113 = vector.shape_cast %112 : vector<16x16x128xbf16> to vector<256x128xbf16>
    %114 = vector.extract_strided_slice %64 {offsets = [16, 0], sizes = [16, 128], strides = [1, 1]} : vector<32x128xf32> to vector<16x128xf32>
    %115 = vector.extract_strided_slice %102 {offsets = [16, 0], sizes = [16, 128], strides = [1, 1]} : vector<32x128xf32> to vector<16x128xf32>
    %116 = vector.shape_cast %114 : vector<16x128xf32> to vector<1x16x128xf32>
    %117 = vector.shape_cast %115 : vector<16x128xf32> to vector<16x1x128xf32>
    %118 = vector.broadcast %116 : vector<1x16x128xf32> to vector<16x16x128xf32>
    %119 = vector.broadcast %117 : vector<16x1x128xf32> to vector<16x16x128xf32>
    %120 = arith.addf %118, %119 : vector<16x16x128xf32>
    %cst_45 = arith.constant 0.000000e+00 : f32
    %121 = vector.broadcast %cst_45 : f32 to vector<16x16x128xf32>
    %122 = arith.maximumf %120, %121 : vector<16x16x128xf32>
    %123 = arith.truncf %122 : vector<16x16x128xf32> to vector<16x16x128xbf16>
    %124 = vector.shape_cast %123 : vector<16x16x128xbf16> to vector<256x128xbf16>
    %125 = tpu.concatenate %113, %124 in 0 : vector<256x128xbf16>, vector<256x128xbf16> -> vector<512x128xbf16>
    %c0_46 = arith.constant 0 : index
    %c0_47 = arith.constant 0 : index
    %126 = vector.load %arg8[%c0_46, %c0_47] : memref<128x128xbf16, #tpu.memory_space<vmem>>, vector<128x128xbf16>
    %cst_48 = arith.constant dense<0.000000e+00> : vector<512x128xf32>
    %127 = tpu.matmul %125, %126, %cst_48 {dimension_numbers = #tpu.dot_dimension_numbers<[1], [0], [0], [1], [0, 0, 1, 1], [], []>} : vector<512x128xbf16>, vector<128x128xbf16>, vector<512x128xf32> -> vector<512x128xf32>
    %c0_49 = arith.constant 0 : index
    %c0_50 = arith.constant 0 : index
    %128 = vector.load %arg9[%c0_49, %c0_50] : memref<1x128xf32, #tpu.memory_space<vmem>>, vector<1x128xf32>
    %129 = vector.broadcast %128 : vector<1x128xf32> to vector<512x128xf32>
    %130 = arith.addf %127, %129 : vector<512x128xf32>
    %cst_51 = arith.constant 0.000000e+00 : f32
    %131 = vector.broadcast %cst_51 : f32 to vector<512x128xf32>
    %132 = arith.maximumf %130, %131 : vector<512x128xf32>
    %133 = vector.shape_cast %132 : vector<512x128xf32> to vector<2x256x128xf32>
    %134 = arith.truncf %133 : vector<2x256x128xf32> to vector<2x256x128xbf16>
    %c0_52 = arith.constant 0 : index
    %c0_53 = arith.constant 0 : index
    %c0_54 = arith.constant 0 : index
    %135 = vector.load %arg10[%c0_52, %c0_53, %c0_54] : memref<2x256x128xbf16, #tpu.memory_space<vmem>>, vector<2x256x128xbf16>
    tpu.vector_store %arg10[%c0_52, %c0_53, %c0_54], %134 {strides = array<i32>} : memref<2x256x128xbf16, #tpu.memory_space<vmem>>, vector<2x256x128xbf16>,
    return
  }
  func.func @transform_0(%arg0: i32) -> (i32, i32, i32) {
    %c0_i32 = arith.constant 0 : i32
    %c0_i32_0 = arith.constant 0 : i32
    %c0_i32_1 = arith.constant 0 : i32
    return %arg0, %c0_i32, %c0_i32_0 : i32, i32, i32
  }
  func.func @transform_1(%arg0: i32) -> (i32, i32) {
    %c0_i32 = arith.constant 0 : i32
    %c0_i32_0 = arith.constant 0 : i32
    %c0_i32_1 = arith.constant 0 : i32
    return %c0_i32, %c0_i32_0 : i32, i32
  }
  func.func @transform_2(%arg0: i32) -> (i32, i32) {
    %c0_i32 = arith.constant 0 : i32
    %c0_i32_0 = arith.constant 0 : i32
    %c0_i32_1 = arith.constant 0 : i32
    return %c0_i32, %c0_i32_0 : i32, i32
  }
  func.func @transform_3(%arg0: i32) -> (i32, i32) {
    %c0_i32 = arith.constant 0 : i32
    %c0_i32_0 = arith.constant 0 : i32
    %c0_i32_1 = arith.constant 0 : i32
    return %c0_i32, %c0_i32_0 : i32, i32
  }
  func.func @transform_4(%arg0: i32) -> (i32, i32) {
    %c0_i32 = arith.constant 0 : i32
    %c0_i32_0 = arith.constant 0 : i32
    %c0_i32_1 = arith.constant 0 : i32
    return %c0_i32, %c0_i32_0 : i32, i32
  }
  func.func @transform_5(%arg0: i32) -> (i32, i32) {
    %c0_i32 = arith.constant 0 : i32
    %c0_i32_0 = arith.constant 0 : i32
    %c0_i32_1 = arith.constant 0 : i32
    return %c0_i32, %c0_i32_0 : i32, i32
  }
  func.func @transform_6(%arg0: i32) -> (i32, i32) {
    %c0_i32 = arith.constant 0 : i32
    %c0_i32_0 = arith.constant 0 : i32
    %c0_i32_1 = arith.constant 0 : i32
    return %c0_i32, %c0_i32_0 : i32, i32
  }
  func.func @transform_7(%arg0: i32) -> (i32, i32) {
    %c0_i32 = arith.constant 0 : i32
    %c0_i32_0 = arith.constant 0 : i32
    %c0_i32_1 = arith.constant 0 : i32
    return %c0_i32, %c0_i32_0 : i32, i32
  }
  func.func @transform_8(%arg0: i32) -> (i32, i32) {
    %c0_i32 = arith.constant 0 : i32
    %c0_i32_0 = arith.constant 0 : i32
    %c0_i32_1 = arith.constant 0 : i32
    return %c0_i32, %c0_i32_0 : i32, i32
  }
  func.func @transform_9(%arg0: i32) -> (i32, i32, i32) {
    %c0_i32 = arith.constant 0 : i32
    %c0_i32_0 = arith.constant 0 : i32
    %c0_i32_1 = arith.constant 0 : i32
    return %arg0, %c0_i32, %c0_i32_0 : i32, i32, i32
  }
}

</mosaic_0001>

<llo_original>
// kernel: tpu_custom_call.1
$region0: #{tpu_custom_call.1}
  #allocation0 [shape = 'u32[]', space=smem, size = 0x4, offset = 0x4, fixed_abs, tag = 'smem constant byte address 0x4 - core index']
  #allocation1 [shape = 'u32[72,128]{1,0:T(1,128)}', space=vmem, size = 0x9000, scoped, tag = 'internal scratch']
  %s0 = inlined_call_operand.vmem [shape: bf16[2,256,16], index: 0, kind: input, shape index: {}]
  %s1 = inlined_call_operand.vmem [shape: bf16[16,128], index: 1, kind: input, shape index: {}]
  %s2 = inlined_call_operand.vmem [shape: f32[1,128], index: 2, kind: input, shape index: {}]
  %s3 = inlined_call_operand.vmem [shape: bf16[384,128], index: 3, kind: input, shape index: {}]
  %s4 = inlined_call_operand.vmem [shape: f32[1,128], index: 4, kind: input, shape index: {}]
  %s5 = inlined_call_operand.hbm [shape: bf16[384,128], index: 5, kind: input, shape index: {}]
  %s6 = inlined_call_operand.vmem [shape: f32[1,128], index: 6, kind: input, shape index: {}]
  %s7 = inlined_call_operand.vmem [shape: bf16[128,128], index: 7, kind: input, shape index: {}]
  %s8 = inlined_call_operand.vmem [shape: f32[1,128], index: 8, kind: input, shape index: {}]
  %s9 = inlined_call_operand.hbm [shape: bf16[2,256,128], index: 9, kind: output, shape index: {}]
  %s10 = sld [smem:[#allocation0]]
  $region50: #{tpu_custom_call.1} parent=0
    _
  %s12 = ssub.s32 1, %s10
  %s13 = scalar_select 0, %s12, %s10
  $region1: #{tpu_custom_call.1} parent=0
    #allocation2 [shape = 'u8[98304]{0}', space=vmem, size = 0x18000, scoped, tag = 'input window, operand 5, single buffered']
    #allocation3 [shape = 's32[1]{0}', space=sflag, size = 0x4, scoped, tag = 'scoped memory for tpu_custom_call.1']
    #allocation4 [shape = 's32[1]{0}', space=sflag, size = 0x4, scoped, tag = 'scoped memory for tpu_custom_call.1']
    #allocation5 [shape = 'u8[131072]{0}', space=vmem, size = 0x20000, scoped, tag = 'output window, operand 0, single buffered']
    %14 = vsyncpa [#allocation3], 0
    %15 = vsyncpa [#allocation4], 0
    // Predicated region
    $region2: #{tpu_custom_call.1} parent=1 // pred_check
      _
    $region3: #{tpu_custom_call.1} parent=1 // pred_check_branch
      %17 = sbr.rel (0) target = $region5
    $region4: #{tpu_custom_call.1} parent=1 // pred_region
      _
    $region5: #{tpu_custom_call.1} parent=1 // pred_fallthru
      _
    // Predicated region
    $region6: #{tpu_custom_call.1} parent=1 // pred_check
      _
    $region7: #{tpu_custom_call.1} parent=1 // pred_check_branch
      %19 = sbr.rel (0) target = $region9
    $region8: #{tpu_custom_call.1} parent=1 // pred_region
      _
    $region9: #{tpu_custom_call.1} parent=1 // pred_fallthru
      _
    // Predicated region
    $region10: #{tpu_custom_call.1} parent=1 // pred_check
      _
    $region11: #{tpu_custom_call.1} parent=1 // pred_check_branch
      %21 = sbr.rel (0) target = $region13
    $region12: #{tpu_custom_call.1} parent=1 // pred_region
      _
    $region13: #{tpu_custom_call.1} parent=1 // pred_fallthru
      _
    // Predicated region
    $region14: #{tpu_custom_call.1} parent=1 // pred_check
      _
    $region15: #{tpu_custom_call.1} parent=1 // pred_check_branch
      %23 = sbr.rel (0) target = $region17
    $region16: #{tpu_custom_call.1} parent=1 // pred_region
      _
    $region17: #{tpu_custom_call.1} parent=1 // pred_fallthru
      _
    // Predicated region
    $region18: #{tpu_custom_call.1} parent=1 // pred_check
      _
    $region19: #{tpu_custom_call.1} parent=1 // pred_check_branch
      %25 = sbr.rel (0) target = $region21
    $region20: #{tpu_custom_call.1} parent=1 // pred_region
      _
    $region21: #{tpu_custom_call.1} parent=1 // pred_fallthru
      _
    // Predicated region
    $region22: #{tpu_custom_call.1} parent=1 // pred_check
      _
    $region23: #{tpu_custom_call.1} parent=1 // pred_check_branch
      %27 = sbr.rel (0) target = $region25
    $region24: #{tpu_custom_call.1} parent=1 // pred_region
      %29 = vsyncadd [#allocation3], 0
      %s30 = sshll.u32 %s5, 4
      %s31 = int_to_ptr.hbm [resolvable:$true] %s30
      %s32 = sshll.u32 [#allocation2], 4
      %s33 = int_to_ptr.vmem [resolvable:$true] %s32
      %38 = dma.hbm_to_vmem [thread:$0]  %s31, 3072, %s33, [#allocation3], 64, 64, 4
    $region25: #{tpu_custom_call.1} parent=1 // pred_fallthru
      _
    // Predicated region
    $region26: #{tpu_custom_call.1} parent=1 // pred_check
      _
    $region27: #{tpu_custom_call.1} parent=1 // pred_check_branch
      %40 = sbr.rel (0) target = $region29
    $region28: #{tpu_custom_call.1} parent=1 // pred_region
      _
    $region29: #{tpu_custom_call.1} parent=1 // pred_fallthru
      _
    // Predicated region
    $region30: #{tpu_custom_call.1} parent=1 // pred_check
      _
    $region31: #{tpu_custom_call.1} parent=1 // pred_check_branch
      %42 = sbr.rel (0) target = $region33
    $region32: #{tpu_custom_call.1} parent=1 // pred_region
      _
    $region33: #{tpu_custom_call.1} parent=1 // pred_fallthru
      _
    // Predicated region
    $region34: #{tpu_custom_call.1} parent=1 // pred_check
      _
    $region35: #{tpu_custom_call.1} parent=1 // pred_check_branch
      %44 = sbr.rel (0) target = $region37
    $region36: #{tpu_custom_call.1} parent=1 // pred_region
      _
    $region37: #{tpu_custom_call.1} parent=1 // pred_fallthru
      _
    // Predicated region
    $region38: #{tpu_custom_call.1} parent=1 // pred_check
      _
    $region39: #{tpu_custom_call.1} parent=1 // pred_check_branch
      %46 = sbr.rel (0) target = $region41
    $region40: #{tpu_custom_call.1} parent=1 // pred_region
      %48 = dma.done [#allocation3], 3072
    $region41: #{tpu_custom_call.1} parent=1 // pred_fallthru
      _
    %v50 = vld [vmem:[%s0] sm:$0xf]
    %v51 = vld [vmem:[%s0 + $0x4] sm:$0xf]
    %v52 = vld [vmem:[%s0 + $0x8] sm:$0xf]
    %v53 = vld [vmem:[%s0 + $0xc] sm:$0xf]
    %v54 = vld [vmem:[%s0 + $0x10] sm:$0xf]
    %v55 = vld [vmem:[%s0 + $0x14] sm:$0xf]
    %v56 = vld [vmem:[%s0 + $0x18] sm:$0xf]
    %v57 = vld [vmem:[%s0 + $0x1c] sm:$0xf]
    %v58 = vld [vmem:[%s0 + $0x20] sm:$0xf]
    %v59 = vld [vmem:[%s0 + $0x24] sm:$0xf]
    %v60 = vld [vmem:[%s0 + $0x28] sm:$0xf]
    %v61 = vld [vmem:[%s0 + $0x2c] sm:$0xf]
    %v62 = vld [vmem:[%s0 + $0x30] sm:$0xf]
    %v63 = vld [vmem:[%s0 + $0x34] sm:$0xf]
    %v64 = vld [vmem:[%s0 + $0x38] sm:$0xf]
    %v65 = vld [vmem:[%s0 + $0x3c] sm:$0xf]
    %v66 = vld [vmem:[%s0 + $0x40] sm:$0xf]
    %v67 = vld [vmem:[%s0 + $0x44] sm:$0xf]
    %v68 = vld [vmem:[%s0 + $0x48] sm:$0xf]
    %v69 = vld [vmem:[%s0 + $0x4c] sm:$0xf]
    %v70 = vld [vmem:[%s0 + $0x50] sm:$0xf]
    %v71 = vld [vmem:[%s0 + $0x54] sm:$0xf]
    %v72 = vld [vmem:[%s0 + $0x58] sm:$0xf]
    %v73 = vld [vmem:[%s0 + $0x5c] sm:$0xf]
    %v74 = vld [vmem:[%s0 + $0x60] sm:$0xf]
    %v75 = vld [vmem:[%s0 + $0x64] sm:$0xf]
    %v76 = vld [vmem:[%s0 + $0x68] sm:$0xf]
    %v77 = vld [vmem:[%s0 + $0x6c] sm:$0xf]
    %v78 = vld [vmem:[%s0 + $0x70] sm:$0xf]
    %v79 = vld [vmem:[%s0 + $0x74] sm:$0xf]
    %v80 = vld [vmem:[%s0 + $0x78] sm:$0xf]
    %v81 = vld [vmem:[%s0 + $0x7c] sm:$0xf]
    %v82 = vld [vmem:[%s0 + $0x80] sm:$0xf]
    %v83 = vld [vmem:[%s0 + $0x84] sm:$0xf]
    %v84 = vld [vmem:[%s0 + $0x88] sm:$0xf]
    %v85 = vld [vmem:[%s0 + $0x8c] sm:$0xf]
    %v86 = vld [vmem:[%s0 + $0x90] sm:$0xf]
    %v87 = vld [vmem:[%s0 + $0x94] sm:$0xf]
    %v88 = vld [vmem:[%s0 + $0x98] sm:$0xf]
    %v89 = vld [vmem:[%s0 + $0x9c] sm:$0xf]
    %v90 = vld [vmem:[%s0 + $0xa0] sm:$0xf]
    %v91 = vld [vmem:[%s0 + $0xa4] sm:$0xf]
    %v92 = vld [vmem:[%s0 + $0xa8] sm:$0xf]
    %v93 = vld [vmem:[%s0 + $0xac] sm:$0xf]
    %v94 = vld [vmem:[%s0 + $0xb0] sm:$0xf]
    %v95 = vld [vmem:[%s0 + $0xb4] sm:$0xf]
    %v96 = vld [vmem:[%s0 + $0xb8] sm:$0xf]
    %v97 = vld [vmem:[%s0 + $0xbc] sm:$0xf]
    %v98 = vld [vmem:[%s0 + $0xc0] sm:$0xf]
    %v99 = vld [vmem:[%s0 + $0xc4] sm:$0xf]
    %v100 = vld [vmem:[%s0 + $0xc8] sm:$0xf]
    %v101 = vld [vmem:[%s0 + $0xcc] sm:$0xf]
    %v102 = vld [vmem:[%s0 + $0xd0] sm:$0xf]
    %v103 = vld [vmem:[%s0 + $0xd4] sm:$0xf]
    %v104 = vld [vmem:[%s0 + $0xd8] sm:$0xf]
    %v105 = vld [vmem:[%s0 + $0xdc] sm:$0xf]
    %v106 = vld [vmem:[%s0 + $0xe0] sm:$0xf]
    %v107 = vld [vmem:[%s0 + $0xe4] sm:$0xf]
    %v108 = vld [vmem:[%s0 + $0xe8] sm:$0xf]
    %v109 = vld [vmem:[%s0 + $0xec] sm:$0xf]
    %v110 = vld [vmem:[%s0 + $0xf0] sm:$0xf]
    %v111 = vld [vmem:[%s0 + $0xf4] sm:$0xf]
    %v112 = vld [vmem:[%s0 + $0xf8] sm:$0xf]
    %v113 = vld [vmem:[%s0 + $0xfc] sm:$0xf]
    %v114 = vld [vmem:[%s1] sm:$0xf]
    %v115 = vld [vmem:[%s1 + $0x4] sm:$0xf]
    %v116 = vld [vmem:[%s2] sm:$0x1]
    %v118 = vperm.slane %v116, 0
    %v184 = vunpack.c.l.b16 %v50
    %v185 = vunpack.c.l.b16 %v51
    %v186 = vunpack.c.l.b16 %v52
    %v187 = vunpack.c.l.b16 %v53
    %v188 = vunpack.c.l.b16 %v54
    %v189 = vunpack.c.l.b16 %v55
    %v190 = vunpack.c.l.b16 %v56
    %v191 = vunpack.c.l.b16 %v57
    %v192 = vunpack.c.l.b16 %v58
    %v193 = vunpack.c.l.b16 %v59
    %v194 = vunpack.c.l.b16 %v60
    %v195 = vunpack.c.l.b16 %v61
    %v196 = vunpack.c.l.b16 %v62
    %v197 = vunpack.c.l.b16 %v63
    %v198 = vunpack.c.l.b16 %v64
    %v199 = vunpack.c.l.b16 %v65
    %v200 = vunpack.c.l.b16 %v66
    %v201 = vunpack.c.l.b16 %v67
    %v202 = vunpack.c.l.b16 %v68
    %v203 = vunpack.c.l.b16 %v69
    %v204 = vunpack.c.l.b16 %v70
    %v205 = vunpack.c.l.b16 %v71
    %v206 = vunpack.c.l.b16 %v72
    %v207 = vunpack.c.l.b16 %v73
    %v208 = vunpack.c.l.b16 %v74
    %v209 = vunpack.c.l.b16 %v75
    %v210 = vunpack.c.l.b16 %v76
    %v211 = vunpack.c.l.b16 %v77
    %v212 = vunpack.c.l.b16 %v78
    %v213 = vunpack.c.l.b16 %v79
    %v214 = vunpack.c.l.b16 %v80
    %v215 = vunpack.c.l.b16 %v81
    %v216 = vunpack.c.l.b16 %v82
    %v217 = vunpack.c.l.b16 %v83
    %v218 = vunpack.c.l.b16 %v84
    %v219 = vunpack.c.l.b16 %v85
    %v220 = vunpack.c.l.b16 %v86
    %v221 = vunpack.c.l.b16 %v87
    %v222 = vunpack.c.l.b16 %v88
    %v223 = vunpack.c.l.b16 %v89
    %v224 = vunpack.c.l.b16 %v90
    %v225 = vunpack.c.l.b16 %v91
    %v226 = vunpack.c.l.b16 %v92
    %v227 = vunpack.c.l.b16 %v93
    %v228 = vunpack.c.l.b16 %v94
    %v229 = vunpack.c.l.b16 %v95
    %v230 = vunpack.c.l.b16 %v96
    %v231 = vunpack.c.l.b16 %v97
    %v232 = vunpack.c.l.b16 %v98
    %v233 = vunpack.c.l.b16 %v99
    %v234 = vunpack.c.l.b16 %v100
    %v235 = vunpack.c.l.b16 %v101
    %v236 = vunpack.c.l.b16 %v102
    %v237 = vunpack.c.l.b16 %v103
    %v238 = vunpack.c.l.b16 %v104
    %v239 = vunpack.c.l.b16 %v105
    %v240 = vunpack.c.l.b16 %v106
    %v241 = vunpack.c.l.b16 %v107
    %v242 = vunpack.c.l.b16 %v108
    %v243 = vunpack.c.l.b16 %v109
    %v244 = vunpack.c.l.b16 %v110
    %v245 = vunpack.c.l.b16 %v111
    %v246 = vunpack.c.l.b16 %v112
    %v247 = vunpack.c.l.b16 %v113
    %v248 = vpack.c.b16 %v185, %v184
    %v249 = vpack.c.b16 %v187, %v186
    %v250 = vpack.c.b16 %v189, %v188
    %v251 = vpack.c.b16 %v191, %v190
    %v252 = vpack.c.b16 %v193, %v192
    %v253 = vpack.c.b16 %v195, %v194
    %v254 = vpack.c.b16 %v197, %v196
    %v255 = vpack.c.b16 %v199, %v198
    %v256 = vpack.c.b16 %v201, %v200
    %v257 = vpack.c.b16 %v203, %v202
    %v258 = vpack.c.b16 %v205, %v204
    %v259 = vpack.c.b16 %v207, %v206
    %v260 = vpack.c.b16 %v209, %v208
    %v261 = vpack.c.b16 %v211, %v210
    %v262 = vpack.c.b16 %v213, %v212
    %v263 = vpack.c.b16 %v215, %v214
    %v264 = vpack.c.b16 %v217, %v216
    %v265 = vpack.c.b16 %v219, %v218
    %v266 = vpack.c.b16 %v221, %v220
    %v267 = vpack.c.b16 %v223, %v222
    %v268 = vpack.c.b16 %v225, %v224
    %v269 = vpack.c.b16 %v227, %v226
    %v270 = vpack.c.b16 %v229, %v228
    %v271 = vpack.c.b16 %v231, %v230
    %v272 = vpack.c.b16 %v233, %v232
    %v273 = vpack.c.b16 %v235, %v234
    %v274 = vpack.c.b16 %v237, %v236
    %v275 = vpack.c.b16 %v239, %v238
    %v276 = vpack.c.b16 %v241, %v240
    %v277 = vpack.c.b16 %v243, %v242
    %v278 = vpack.c.b16 %v245, %v244
    %v279 = vpack.c.b16 %v247, %v246
    %v282 = vunpack.c.l.b16 %v114
    %v283 = vunpack.c.l.b16 %v115
    %v284 = vpack.c.b16 %v283, %v282
    %vm286 = vcmask 130048
    %v288 = vsel %vm286, %v248, 0
    %v291 = vsel %vm286, %v249, 0
    %v294 = vsel %vm286, %v250, 0
    %v297 = vsel %vm286, %v251, 0
    %v300 = vsel %vm286, %v252, 0
    %v303 = vsel %vm286, %v253, 0
    %v306 = vsel %vm286, %v254, 0
    %v309 = vsel %vm286, %v255, 0
    %v312 = vsel %vm286, %v256, 0
    %v315 = vsel %vm286, %v257, 0
    %v318 = vsel %vm286, %v258, 0
    %v321 = vsel %vm286, %v259, 0
    %v324 = vsel %vm286, %v260, 0
    %v327 = vsel %vm286, %v261, 0
    %v330 = vsel %vm286, %v262, 0
    %v333 = vsel %vm286, %v263, 0
    %v336 = vsel %vm286, %v264, 0
    %v339 = vsel %vm286, %v265, 0
    %v342 = vsel %vm286, %v266, 0
    %v345 = vsel %vm286, %v267, 0
    %v348 = vsel %vm286, %v268, 0
    %v351 = vsel %vm286, %v269, 0
    %v354 = vsel %vm286, %v270, 0
    %v357 = vsel %vm286, %v271, 0
    %v360 = vsel %vm286, %v272, 0
    %v363 = vsel %vm286, %v273, 0
    %v366 = vsel %vm286, %v274, 0
    %v369 = vsel %vm286, %v275, 0
    %v372 = vsel %vm286, %v276, 0
    %v375 = vsel %vm286, %v277, 0
    %v378 = vsel %vm286, %v278, 0
    %v381 = vsel %vm286, %v279, 0
    %383 = vmatpush.bf16.msra.mxu0 0
    %384 = vmatpush.bf16.msra.mxu0 0
    %385 = vmatpush.bf16.msra.mxu0 0
    %386 = vmatpush.bf16.msra.mxu0 0
    %387 = vmatpush.bf16.msra.mxu0 0
    %388 = vmatpush.bf16.msra.mxu0 0
    %389 = vmatpush.bf16.msra.mxu0 0
    %390 = vmatpush.bf16.msra.mxu0 %v284
    %391 = vmatmul.bf16.gmra.mxu0 %v288
    %v392 = vpop.f32.mrf.mxu0
    %v393 = vadd.f32 %v118, %v392
    %v394 = vpop.f32.mrf.mxu0
    %v395 = vadd.f32 %v118, %v394
    %396 = vmatmul.bf16.gmra.mxu0 %v291
    %v397 = vpop.f32.mrf.mxu0
    %v398 = vadd.f32 %v118, %v397
    %v399 = vpop.f32.mrf.mxu0
    %v400 = vadd.f32 %v118, %v399
    %401 = vmatmul.bf16.gmra.mxu0 %v294
    %v402 = vpop.f32.mrf.mxu0
    %v403 = vadd.f32 %v118, %v402
    %v404 = vpop.f32.mrf.mxu0
    %v405 = vadd.f32 %v118, %v404
    %406 = vmatmul.bf16.gmra.mxu0 %v297
    %v407 = vpop.f32.mrf.mxu0
    %v408 = vadd.f32 %v118, %v407
    %v409 = vpop.f32.mrf.mxu0
    %v410 = vadd.f32 %v118, %v409
    %411 = vmatmul.bf16.gmra.mxu0 %v300
    %v412 = vpop.f32.mrf.mxu0
    %v413 = vadd.f32 %v118, %v412
    %v414 = vpop.f32.mrf.mxu0
    %v415 = vadd.f32 %v118, %v414
    %416 = vmatmul.bf16.gmra.mxu0 %v303
    %v417 = vpop.f32.mrf.mxu0
    %v418 = vadd.f32 %v118, %v417
    %v419 = vpop.f32.mrf.mxu0
    %v420 = vadd.f32 %v118, %v419
    %421 = vmatmul.bf16.gmra.mxu0 %v306
    %v422 = vpop.f32.mrf.mxu0
    %v423 = vadd.f32 %v118, %v422
    %v424 = vpop.f32.mrf.mxu0
    %v425 = vadd.f32 %v118, %v424
    %426 = vmatmul.bf16.gmra.mxu0 %v309
    %v427 = vpop.f32.mrf.mxu0
    %v428 = vadd.f32 %v118, %v427
    %v429 = vpop.f32.mrf.mxu0
    %v430 = vadd.f32 %v118, %v429
    %431 = vmatmul.bf16.gmra.mxu0 %v312
    %v432 = vpop.f32.mrf.mxu0
    %v433 = vadd.f32 %v118, %v432
    %v434 = vpop.f32.mrf.mxu0
    %v435 = vadd.f32 %v118, %v434
    %436 = vmatmul.bf16.gmra.mxu0 %v315
    %v437 = vpop.f32.mrf.mxu0
    %v438 = vadd.f32 %v118, %v437
    %v439 = vpop.f32.mrf.mxu0
    %v440 = vadd.f32 %v118, %v439
    %441 = vmatmul.bf16.gmra.mxu0 %v318
    %v442 = vpop.f32.mrf.mxu0
    %v443 = vadd.f32 %v118, %v442
    %v444 = vpop.f32.mrf.mxu0
    %v445 = vadd.f32 %v118, %v444
    %446 = vmatmul.bf16.gmra.mxu0 %v321
    %v447 = vpop.f32.mrf.mxu0
    %v448 = vadd.f32 %v118, %v447
    %v449 = vpop.f32.mrf.mxu0
    %v450 = vadd.f32 %v118, %v449
    %451 = vmatmul.bf16.gmra.mxu0 %v324
    %v452 = vpop.f32.mrf.mxu0
    %v453 = vadd.f32 %v118, %v452
    %v454 = vpop.f32.mrf.mxu0
    %v455 = vadd.f32 %v118, %v454
    %456 = vmatmul.bf16.gmra.mxu0 %v327
    %v457 = vpop.f32.mrf.mxu0
    %v458 = vadd.f32 %v118, %v457
    %v459 = vpop.f32.mrf.mxu0
    %v460 = vadd.f32 %v118, %v459
    %461 = vmatmul.bf16.gmra.mxu0 %v330
    %v462 = vpop.f32.mrf.mxu0
    %v463 = vadd.f32 %v118, %v462
    %v464 = vpop.f32.mrf.mxu0
    %v465 = vadd.f32 %v118, %v464
    %466 = vmatmul.bf16.gmra.mxu0 %v333
    %v467 = vpop.f32.mrf.mxu0
    %v468 = vadd.f32 %v118, %v467
    %v469 = vpop.f32.mrf.mxu0
    %v470 = vadd.f32 %v118, %v469
    %471 = vmatmul.bf16.gmra.mxu0 %v336
    %v472 = vpop.f32.mrf.mxu0
    %v473 = vadd.f32 %v118, %v472
    %v474 = vpop.f32.mrf.mxu0
    %v475 = vadd.f32 %v118, %v474
    %476 = vmatmul.bf16.gmra.mxu0 %v339
    %v477 = vpop.f32.mrf.mxu0
    %v478 = vadd.f32 %v118, %v477
    %v479 = vpop.f32.mrf.mxu0
    %v480 = vadd.f32 %v118, %v479
    %481 = vmatmul.bf16.gmra.mxu0 %v342
    %v482 = vpop.f32.mrf.mxu0
    %v483 = vadd.f32 %v118, %v482
    %v484 = vpop.f32.mrf.mxu0
    %v485 = vadd.f32 %v118, %v484
    %486 = vmatmul.bf16.gmra.mxu0 %v345
    %v487 = vpop.f32.mrf.mxu0
    %v488 = vadd.f32 %v118, %v487
    %v489 = vpop.f32.mrf.mxu0
    %v490 = vadd.f32 %v118, %v489
    %491 = vmatmul.bf16.gmra.mxu0 %v348
    %v492 = vpop.f32.mrf.mxu0
    %v493 = vadd.f32 %v118, %v492
    %v494 = vpop.f32.mrf.mxu0
    %v495 = vadd.f32 %v118, %v494
    %496 = vmatmul.bf16.gmra.mxu0 %v351
    %v497 = vpop.f32.mrf.mxu0
    %v498 = vadd.f32 %v118, %v497
    %v499 = vpop.f32.mrf.mxu0
    %v500 = vadd.f32 %v118, %v499
    %501 = vmatmul.bf16.gmra.mxu0 %v354
    %v502 = vpop.f32.mrf.mxu0
    %v503 = vadd.f32 %v118, %v502
    %v504 = vpop.f32.mrf.mxu0
    %v505 = vadd.f32 %v118, %v504
    %506 = vmatmul.bf16.gmra.mxu0 %v357
    %v507 = vpop.f32.mrf.mxu0
    %v508 = vadd.f32 %v118, %v507
    %v509 = vpop.f32.mrf.mxu0
    %v510 = vadd.f32 %v118, %v509
    %511 = vmatmul.bf16.gmra.mxu0 %v360
    %v512 = vpop.f32.mrf.mxu0
    %v513 = vadd.f32 %v118, %v512
    %v514 = vpop.f32.mrf.mxu0
    %v515 = vadd.f32 %v118, %v514
    %516 = vmatmul.bf16.gmra.mxu0 %v363
    %v517 = vpop.f32.mrf.mxu0
    %v518 = vadd.f32 %v118, %v517
    %v519 = vpop.f32.mrf.mxu0
    %v520 = vadd.f32 %v118, %v519
    %521 = vmatmul.bf16.gmra.mxu0 %v366
    %v522 = vpop.f32.mrf.mxu0
    %v523 = vadd.f32 %v118, %v522
    %v524 = vpop.f32.mrf.mxu0
    %v525 = vadd.f32 %v118, %v524
    %526 = vmatmul.bf16.gmra.mxu0 %v369
    %v527 = vpop.f32.mrf.mxu0
    %v528 = vadd.f32 %v118, %v527
    %v529 = vpop.f32.mrf.mxu0
    %v530 = vadd.f32 %v118, %v529
    %531 = vmatmul.bf16.gmra.mxu0 %v372
    %v532 = vpop.f32.mrf.mxu0
    %v533 = vadd.f32 %v118, %v532
    %v534 = vpop.f32.mrf.mxu0
    %v535 = vadd.f32 %v118, %v534
    %536 = vmatmul.bf16.gmra.mxu0 %v375
    %v537 = vpop.f32.mrf.mxu0
    %v538 = vadd.f32 %v118, %v537
    %v539 = vpop.f32.mrf.mxu0
    %v540 = vadd.f32 %v118, %v539
    %541 = vmatmul.bf16.gmra.mxu0 %v378
    %v542 = vpop.f32.mrf.mxu0
    %v543 = vadd.f32 %v118, %v542
    %v544 = vpop.f32.mrf.mxu0
    %v545 = vadd.f32 %v118, %v544
    %546 = vmatmul.bf16.gmra.mxu0 %v381
    %v547 = vpop.f32.mrf.mxu0
    %v548 = vadd.f32 %v118, %v547
    %v549 = vpop.f32.mrf.mxu0
    %v550 = vadd.f32 %v118, %v549
    %551 = vdwg.mxu0
    %v552 = vmax.f32 %v393, 0.0
    %v553 = vmax.f32 %v395, 0.0
    %v554 = vmax.f32 %v398, 0.0
    %v555 = vmax.f32 %v400, 0.0
    %v556 = vmax.f32 %v403, 0.0
    %v557 = vmax.f32 %v405, 0.0
    %v558 = vmax.f32 %v408, 0.0
    %v559 = vmax.f32 %v410, 0.0
    %v560 = vmax.f32 %v413, 0.0
    %v561 = vmax.f32 %v415, 0.0
    %v562 = vmax.f32 %v418, 0.0
    %v563 = vmax.f32 %v420, 0.0
    %v564 = vmax.f32 %v423, 0.0
    %v565 = vmax.f32 %v425, 0.0
    %v566 = vmax.f32 %v428, 0.0
    %v567 = vmax.f32 %v430, 0.0
    %v568 = vmax.f32 %v433, 0.0
    %v569 = vmax.f32 %v435, 0.0
    %v570 = vmax.f32 %v438, 0.0
    %v571 = vmax.f32 %v440, 0.0
    %v572 = vmax.f32 %v443, 0.0
    %v573 = vmax.f32 %v445, 0.0
    %v574 = vmax.f32 %v448, 0.0
    %v575 = vmax.f32 %v450, 0.0
    %v576 = vmax.f32 %v453, 0.0
    %v577 = vmax.f32 %v455, 0.0
    %v578 = vmax.f32 %v458, 0.0
    %v579 = vmax.f32 %v460, 0.0
    %v580 = vmax.f32 %v463, 0.0
    %v581 = vmax.f32 %v465, 0.0
    %v582 = vmax.f32 %v468, 0.0
    %v583 = vmax.f32 %v470, 0.0
    %v584 = vmax.f32 %v473, 0.0
    %v585 = vmax.f32 %v475, 0.0
    %v586 = vmax.f32 %v478, 0.0
    %v587 = vmax.f32 %v480, 0.0
    %v588 = vmax.f32 %v483, 0.0
    %v589 = vmax.f32 %v485, 0.0
    %v590 = vmax.f32 %v488, 0.0
    %v591 = vmax.f32 %v490, 0.0
    %v592 = vmax.f32 %v493, 0.0
    %v593 = vmax.f32 %v495, 0.0
    %v594 = vmax.f32 %v498, 0.0
    %v595 = vmax.f32 %v500, 0.0
    %v596 = vmax.f32 %v503, 0.0
    %v597 = vmax.f32 %v505, 0.0
    %v598 = vmax.f32 %v508, 0.0
    %v599 = vmax.f32 %v510, 0.0
    %v600 = vmax.f32 %v513, 0.0
    %v601 = vmax.f32 %v515, 0.0
    %v602 = vmax.f32 %v518, 0.0
    %v603 = vmax.f32 %v520, 0.0
    %v604 = vmax.f32 %v523, 0.0
    %v605 = vmax.f32 %v525, 0.0
    %v606 = vmax.f32 %v528, 0.0
    %v607 = vmax.f32 %v530, 0.0
    %v608 = vmax.f32 %v533, 0.0
    %v609 = vmax.f32 %v535, 0.0
    %v610 = vmax.f32 %v538, 0.0
    %v611 = vmax.f32 %v540, 0.0
    %v612 = vmax.f32 %v543, 0.0
    %v613 = vmax.f32 %v545, 0.0
    %v614 = vmax.f32 %v548, 0.0
    %v615 = vmax.f32 %v550, 0.0
    %v616 = vadd.f32 %v552, %v554
    %v617 = vadd.f32 %v616, %v556
    %v618 = vadd.f32 %v617, %v558
    %v619 = vadd.f32 %v618, %v560
    %v620 = vadd.f32 %v619, %v562
    %v621 = vadd.f32 %v620, %v564
    %v622 = vadd.f32 %v621, %v566
    %v623 = vadd.f32 %v622, %v568
    %v624 = vadd.f32 %v623, %v570
    %v625 = vadd.f32 %v624, %v572
    %v626 = vadd.f32 %v625, %v574
    %v627 = vadd.f32 %v626, %v576
    %v628 = vadd.f32 %v627, %v578
    %v629 = vadd.f32 %v628, %v580
    %v630 = vadd.f32 %v629, %v582
    %v631 = vadd.f32 %v553, %v555
    %v632 = vadd.f32 %v631, %v557
    %v633 = vadd.f32 %v632, %v559
    %v634 = vadd.f32 %v633, %v561
    %v635 = vadd.f32 %v634, %v563
    %v636 = vadd.f32 %v635, %v565
    %v637 = vadd.f32 %v636, %v567
    %v638 = vadd.f32 %v637, %v569
    %v639 = vadd.f32 %v638, %v571
    %v640 = vadd.f32 %v639, %v573
    %v641 = vadd.f32 %v640, %v575
    %v642 = vadd.f32 %v641, %v577
    %v643 = vadd.f32 %v642, %v579
    %v644 = vadd.f32 %v643, %v581
    %v645 = vadd.f32 %v644, %v583
    %v646 = vrcp.pop 16.0
    %v647 = vmul.f32 16.0, %v646
    %v648 = vsub.f32 1.0, %v647
    %v649 = vmul.f32 %v646, %v648
    %v650 = vadd.f32 %v646, %v649
    %vm651 = vweird.f32 %v646
    %v652 = vsel %vm651, %v646, %v650
    %v653 = vmul.f32 %v630, %v652
    %v654 = vmul.f32 %v645, %v652
    %v655 = vadd.f32 %v552, %v553
    %v656 = vrot.slane %v655, 4
    %v657 = vadd.f32 %v655, %v656
    %v658 = vrot.slane %v657, 2
    %v659 = vadd.f32 %v657, %v658
    %v660 = vrot.slane %v659, 1
    %v661 = vadd.f32 %v659, %v660
    %v662 = vadd.f32 %v554, %v555
    %v663 = vrot.slane %v662, 4
    %v664 = vadd.f32 %v662, %v663
    %v665 = vrot.slane %v664, 2
    %v666 = vadd.f32 %v664, %v665
    %v667 = vrot.slane %v666, 1
    %v668 = vadd.f32 %v666, %v667
    %v669 = vadd.f32 %v556, %v557
    %v670 = vrot.slane %v669, 4
    %v671 = vadd.f32 %v669, %v670
    %v672 = vrot.slane %v671, 2
    %v673 = vadd.f32 %v671, %v672
    %v674 = vrot.slane %v673, 1
    %v675 = vadd.f32 %v673, %v674
    %v676 = vadd.f32 %v558, %v559
    %v677 = vrot.slane %v676, 4
    %v678 = vadd.f32 %v676, %v677
    %v679 = vrot.slane %v678, 2
    %v680 = vadd.f32 %v678, %v679
    %v681 = vrot.slane %v680, 1
    %v682 = vadd.f32 %v680, %v681
    %v683 = vadd.f32 %v560, %v561
    %v684 = vrot.slane %v683, 4
    %v685 = vadd.f32 %v683, %v684
    %v686 = vrot.slane %v685, 2
    %v687 = vadd.f32 %v685, %v686
    %v688 = vrot.slane %v687, 1
    %v689 = vadd.f32 %v687, %v688
    %v690 = vadd.f32 %v562, %v563
    %v691 = vrot.slane %v690, 4
    %v692 = vadd.f32 %v690, %v691
    %v693 = vrot.slane %v692, 2
    %v694 = vadd.f32 %v692, %v693
    %v695 = vrot.slane %v694, 1
    %v696 = vadd.f32 %v694, %v695
    %v697 = vadd.f32 %v564, %v565
    %v698 = vrot.slane %v697, 4
    %v699 = vadd.f32 %v697, %v698
    %v700 = vrot.slane %v699, 2
    %v701 = vadd.f32 %v699, %v700
    %v702 = vrot.slane %v701, 1
    %v703 = vadd.f32 %v701, %v702
    %v704 = vadd.f32 %v566, %v567
    %v705 = vrot.slane %v704, 4
    %v706 = vadd.f32 %v704, %v705
    %v707 = vrot.slane %v706, 2
    %v708 = vadd.f32 %v706, %v707
    %v709 = vrot.slane %v708, 1
    %v710 = vadd.f32 %v708, %v709
    %v711 = vadd.f32 %v568, %v569
    %v712 = vrot.slane %v711, 4
    %v713 = vadd.f32 %v711, %v712
    %v714 = vrot.slane %v713, 2
    %v715 = vadd.f32 %v713, %v714
    %v716 = vrot.slane %v715, 1
    %v717 = vadd.f32 %v715, %v716
    %v718 = vadd.f32 %v570, %v571
    %v719 = vrot.slane %v718, 4
    %v720 = vadd.f32 %v718, %v719
    %v721 = vrot.slane %v720, 2
    %v722 = vadd.f32 %v720, %v721
    %v723 = vrot.slane %v722, 1
    %v724 = vadd.f32 %v722, %v723
    %v725 = vadd.f32 %v572, %v573
    %v726 = vrot.slane %v725, 4
    %v727 = vadd.f32 %v725, %v726
    %v728 = vrot.slane %v727, 2
    %v729 = vadd.f32 %v727, %v728
    %v730 = vrot.slane %v729, 1
    %v731 = vadd.f32 %v729, %v730
    %v732 = vadd.f32 %v574, %v575
    %v733 = vrot.slane %v732, 4
    %v734 = vadd.f32 %v732, %v733
    %v735 = vrot.slane %v734, 2
    %v736 = vadd.f32 %v734, %v735
    %v737 = vrot.slane %v736, 1
    %v738 = vadd.f32 %v736, %v737
    %v739 = vadd.f32 %v576, %v577
    %v740 = vrot.slane %v739, 4
    %v741 = vadd.f32 %v739, %v740
    %v742 = vrot.slane %v741, 2
    %v743 = vadd.f32 %v741, %v742
    %v744 = vrot.slane %v743, 1
    %v745 = vadd.f32 %v743, %v744
    %v746 = vadd.f32 %v578, %v579
    %v747 = vrot.slane %v746, 4
    %v748 = vadd.f32 %v746, %v747
    %v749 = vrot.slane %v748, 2
    %v750 = vadd.f32 %v748, %v749
    %v751 = vrot.slane %v750, 1
    %v752 = vadd.f32 %v750, %v751
    %v753 = vadd.f32 %v580, %v581
    %v754 = vrot.slane %v753, 4
    %v755 = vadd.f32 %v753, %v754
    %v756 = vrot.slane %v755, 2
    %v757 = vadd.f32 %v755, %v756
    %v758 = vrot.slane %v757, 1
    %v759 = vadd.f32 %v757, %v758
    %v760 = vadd.f32 %v582, %v583
    %v761 = vrot.slane %v760, 4
    %v762 = vadd.f32 %v760, %v761
    %v763 = vrot.slane %v762, 2
    %v764 = vadd.f32 %v762, %v763
    %v765 = vrot.slane %v764, 1
    %v766 = vadd.f32 %v764, %v765
    %v767 = vmul.f32 %v661, %v652
    %v768 = vmul.f32 %v668, %v652
    %v769 = vmul.f32 %v675, %v652
    %v770 = vmul.f32 %v682, %v652
    %v771 = vmul.f32 %v689, %v652
    %v772 = vmul.f32 %v696, %v652
    %v773 = vmul.f32 %v703, %v652
    %v774 = vmul.f32 %v710, %v652
    %v775 = vmul.f32 %v717, %v652
    %v776 = vmul.f32 %v724, %v652
    %v777 = vmul.f32 %v731, %v652
    %v778 = vmul.f32 %v738, %v652
    %v779 = vmul.f32 %v745, %v652
    %v780 = vmul.f32 %v752, %v652
    %v781 = vmul.f32 %v759, %v652
    %v782 = vmul.f32 %v766, %v652
    %v783 = vadd.f32 %v584, %v586
    %v784 = vadd.f32 %v783, %v588
    %v785 = vadd.f32 %v784, %v590
    %v786 = vadd.f32 %v785, %v592
    %v787 = vadd.f32 %v786, %v594
    %v788 = vadd.f32 %v787, %v596
    %v789 = vadd.f32 %v788, %v598
    %v790 = vadd.f32 %v789, %v600
    %v791 = vadd.f32 %v790, %v602
    %v792 = vadd.f32 %v791, %v604
    %v793 = vadd.f32 %v792, %v606
    %v794 = vadd.f32 %v793, %v608
    %v795 = vadd.f32 %v794, %v610
    %v796 = vadd.f32 %v795, %v612
    %v797 = vadd.f32 %v796, %v614
    %v798 = vadd.f32 %v585, %v587
    %v799 = vadd.f32 %v798, %v589
    %v800 = vadd.f32 %v799, %v591
    %v801 = vadd.f32 %v800, %v593
    %v802 = vadd.f32 %v801, %v595
    %v803 = vadd.f32 %v802, %v597
    %v804 = vadd.f32 %v803, %v599
    %v805 = vadd.f32 %v804, %v601
    %v806 = vadd.f32 %v805, %v603
    %v807 = vadd.f32 %v806, %v605
    %v808 = vadd.f32 %v807, %v607
    %v809 = vadd.f32 %v808, %v609
    %v810 = vadd.f32 %v809, %v611
    %v811 = vadd.f32 %v810, %v613
    %v812 = vadd.f32 %v811, %v615
    %v813 = vmul.f32 %v797, %v652
    %v814 = vmul.f32 %v812, %v652
    %v815 = vadd.f32 %v584, %v585
    %v816 = vrot.slane %v815, 4
    %v817 = vadd.f32 %v815, %v816
    %v818 = vrot.slane %v817, 2
    %v819 = vadd.f32 %v817, %v818
    %v820 = vrot.slane %v819, 1
    %v821 = vadd.f32 %v819, %v820
    %v822 = vadd.f32 %v586, %v587
    %v823 = vrot.slane %v822, 4
    %v824 = vadd.f32 %v822, %v823
    %v825 = vrot.slane %v824, 2
    %v826 = vadd.f32 %v824, %v825
    %v827 = vrot.slane %v826, 1
    %v828 = vadd.f32 %v826, %v827
    %v829 = vadd.f32 %v588, %v589
    %v830 = vrot.slane %v829, 4
    %v831 = vadd.f32 %v829, %v830
    %v832 = vrot.slane %v831, 2
    %v833 = vadd.f32 %v831, %v832
    %v834 = vrot.slane %v833, 1
    %v835 = vadd.f32 %v833, %v834
    %v836 = vadd.f32 %v590, %v591
    %v837 = vrot.slane %v836, 4
    %v838 = vadd.f32 %v836, %v837
    %v839 = vrot.slane %v838, 2
    %v840 = vadd.f32 %v838, %v839
    %v841 = vrot.slane %v840, 1
    %v842 = vadd.f32 %v840, %v841
    %v843 = vadd.f32 %v592, %v593
    %v844 = vrot.slane %v843, 4
    %v845 = vadd.f32 %v843, %v844
    %v846 = vrot.slane %v845, 2
    %v847 = vadd.f32 %v845, %v846
    %v848 = vrot.slane %v847, 1
    %v849 = vadd.f32 %v847, %v848
    %v850 = vadd.f32 %v594, %v595
    %v851 = vrot.slane %v850, 4
    %v852 = vadd.f32 %v850, %v851
    %v853 = vrot.slane %v852, 2
    %v854 = vadd.f32 %v852, %v853
    %v855 = vrot.slane %v854, 1
    %v856 = vadd.f32 %v854, %v855
    %v857 = vadd.f32 %v596, %v597
    %v858 = vrot.slane %v857, 4
    %v859 = vadd.f32 %v857, %v858
    %v860 = vrot.slane %v859, 2
    %v861 = vadd.f32 %v859, %v860
    %v862 = vrot.slane %v861, 1
    %v863 = vadd.f32 %v861, %v862
    %v864 = vadd.f32 %v598, %v599
    %v865 = vrot.slane %v864, 4
    %v866 = vadd.f32 %v864, %v865
    %v867 = vrot.slane %v866, 2
    %v868 = vadd.f32 %v866, %v867
    %v869 = vrot.slane %v868, 1
    %v870 = vadd.f32 %v868, %v869
    %v871 = vadd.f32 %v600, %v601
    %v872 = vrot.slane %v871, 4
    %v873 = vadd.f32 %v871, %v872
    %v874 = vrot.slane %v873, 2
    %v875 = vadd.f32 %v873, %v874
    %v876 = vrot.slane %v875, 1
    %v877 = vadd.f32 %v875, %v876
    %v878 = vadd.f32 %v602, %v603
    %v879 = vrot.slane %v878, 4
    %v880 = vadd.f32 %v878, %v879
    %v881 = vrot.slane %v880, 2
    %v882 = vadd.f32 %v880, %v881
    %v883 = vrot.slane %v882, 1
    %v884 = vadd.f32 %v882, %v883
    %v885 = vadd.f32 %v604, %v605
    %v886 = vrot.slane %v885, 4
    %v887 = vadd.f32 %v885, %v886
    %v888 = vrot.slane %v887, 2
    %v889 = vadd.f32 %v887, %v888
    %v890 = vrot.slane %v889, 1
    %v891 = vadd.f32 %v889, %v890
    %v892 = vadd.f32 %v606, %v607
    %v893 = vrot.slane %v892, 4
    %v894 = vadd.f32 %v892, %v893
    %v895 = vrot.slane %v894, 2
    %v896 = vadd.f32 %v894, %v895
    %v897 = vrot.slane %v896, 1
    %v898 = vadd.f32 %v896, %v897
    %v899 = vadd.f32 %v608, %v609
    %v900 = vrot.slane %v899, 4
    %v901 = vadd.f32 %v899, %v900
    %v902 = vrot.slane %v901, 2
    %v903 = vadd.f32 %v901, %v902
    %v904 = vrot.slane %v903, 1
    %v905 = vadd.f32 %v903, %v904
    %v906 = vadd.f32 %v610, %v611
    %v907 = vrot.slane %v906, 4
    %v908 = vadd.f32 %v906, %v907
    %v909 = vrot.slane %v908, 2
    %v910 = vadd.f32 %v908, %v909
    %v911 = vrot.slane %v910, 1
    %v912 = vadd.f32 %v910, %v911
    %v913 = vadd.f32 %v612, %v613
    %v914 = vrot.slane %v913, 4
    %v915 = vadd.f32 %v913, %v914
    %v916 = vrot.slane %v915, 2
    %v917 = vadd.f32 %v915, %v916
    %v918 = vrot.slane %v917, 1
    %v919 = vadd.f32 %v917, %v918
    %v920 = vadd.f32 %v614, %v615
    %v921 = vrot.slane %v920, 4
    %v922 = vadd.f32 %v920, %v921
    %v923 = vrot.slane %v922, 2
    %v924 = vadd.f32 %v922, %v923
    %v925 = vrot.slane %v924, 1
    %v926 = vadd.f32 %v924, %v925
    %v927 = vmul.f32 %v821, %v652
    %v928 = vmul.f32 %v828, %v652
    %v929 = vmul.f32 %v835, %v652
    %v930 = vmul.f32 %v842, %v652
    %v931 = vmul.f32 %v849, %v652
    %v932 = vmul.f32 %v856, %v652
    %v933 = vmul.f32 %v863, %v652
    %v934 = vmul.f32 %v870, %v652
    %v935 = vmul.f32 %v877, %v652
    %v936 = vmul.f32 %v884, %v652
    %v937 = vmul.f32 %v891, %v652
    %v938 = vmul.f32 %v898, %v652
    %v939 = vmul.f32 %v905, %v652
    %v940 = vmul.f32 %v912, %v652
    %v941 = vmul.f32 %v919, %v652
    %v942 = vmul.f32 %v926, %v652
    %vm959 = vcmask 1041409
    %v960 = vsel %vm959, %v768, %v767
    %vm961 = vcmask 1042434
    %v962 = vsel %vm961, %v769, %v960
    %vm963 = vcmask 1043459
    %v964 = vsel %vm963, %v770, %v962
    %vm965 = vcmask 1044484
    %v966 = vsel %vm965, %v771, %v964
    %vm967 = vcmask 1045509
    %v968 = vsel %vm967, %v772, %v966
    %vm969 = vcmask 1046534
    %v970 = vsel %vm969, %v773, %v968
    %vm971 = vcmask 1047559
    %v972 = vsel %vm971, %v774, %v970
    %v973 = vsel %vm959, %v776, %v775
    %v974 = vsel %vm961, %v777, %v973
    %v975 = vsel %vm963, %v778, %v974
    %v976 = vsel %vm965, %v779, %v975
    %v977 = vsel %vm967, %v780, %v976
    %v978 = vsel %vm969, %v781, %v977
    %v979 = vsel %vm971, %v782, %v978
    %v998 = vsel %vm959, %v928, %v927
    %v999 = vsel %vm961, %v929, %v998
    %v1000 = vsel %vm963, %v930, %v999
    %v1001 = vsel %vm965, %v931, %v1000
    %v1002 = vsel %vm967, %v932, %v1001
    %v1003 = vsel %vm969, %v933, %v1002
    %v1004 = vsel %vm971, %v934, %v1003
    %v1005 = vsel %vm959, %v936, %v935
    %v1006 = vsel %vm961, %v937, %v1005
    %v1007 = vsel %vm963, %v938, %v1006
    %v1008 = vsel %vm965, %v939, %v1007
    %v1009 = vsel %vm967, %v940, %v1008
    %v1010 = vsel %vm969, %v941, %v1009
    %v1011 = vsel %vm971, %v942, %v1010
    %v1014 = vlaneseq
    %v1015 = vshrl.u32 %v1014, 7
    %v1016 = vadd.s32 %v1015, 8
    %v1017 = vadd.s32 %v1015, 16
    %v1018 = vadd.s32 %v1015, 24
    %vm1019 = vcmp.lt.s32.totalorder %v1015, 0
    %v1020 = vsub.s32 0, %v1015
    %v1021 = vsel %vm1019, %v1020, %v1015
    %v1022 = vshrl.u32 %v1021, 4
    %v1023 = vand.u32 %v1021, 15
    %v1024 = vsub.s32 0, %v1023
    %v1025 = vsel %vm1019, %v1024, %v1023
    %vm1026 = vcmp.lt.s32.totalorder %v1016, 0
    %v1027 = vsub.s32 0, %v1016
    %v1028 = vsel %vm1026, %v1027, %v1016
    %v1029 = vshrl.u32 %v1028, 4
    %v1030 = vand.u32 %v1028, 15
    %v1031 = vsub.s32 0, %v1030
    %v1032 = vsel %vm1026, %v1031, %v1030
    %vm1033 = vcmp.lt.s32.totalorder %v1017, 0
    %v1034 = vsub.s32 0, %v1017
    %v1035 = vsel %vm1033, %v1034, %v1017
    %v1036 = vshrl.u32 %v1035, 4
    %v1037 = vand.u32 %v1035, 15
    %v1038 = vsub.s32 0, %v1037
    %v1039 = vsel %vm1033, %v1038, %v1037
    %vm1040 = vcmp.lt.s32.totalorder %v1018, 0
    %v1041 = vsub.s32 0, %v1018
    %v1042 = vsel %vm1040, %v1041, %v1018
    %v1043 = vshrl.u32 %v1042, 4
    %v1044 = vand.u32 %v1042, 15
    %v1045 = vsub.s32 0, %v1044
    %v1046 = vsel %vm1040, %v1045, %v1044
    %vm1047 = vcmp.ne.s32.totalorder %v1025, 0
    %vm1048 = vcmp.ne.s32.totalorder %v1032, 0
    %vm1049 = vcmp.ne.s32.totalorder %v1039, 0
    %vm1050 = vcmp.ne.s32.totalorder %v1046, 0
    %vm1051 = vcmp.lt.s32.totalorder %v1025, 0
    %vm1052 = vcmp.lt.s32.totalorder %v1032, 0
    %vm1053 = vcmp.lt.s32.totalorder %v1039, 0
    %vm1054 = vcmp.lt.s32.totalorder %v1046, 0
    %vm1055 = vmand %vm1051, %vm1047
    %vm1056 = vmand %vm1052, %vm1048
    %vm1057 = vmand %vm1053, %vm1049
    %vm1058 = vmand %vm1054, %vm1050
    %v1059 = vadd.s32 %v1025, 16
    %v1060 = vadd.s32 %v1032, 16
    %v1061 = vadd.s32 %v1039, 16
    %v1062 = vadd.s32 %v1046, 16
    %v1063 = vsel %vm1055, %v1059, %v1025
    %v1064 = vsel %vm1056, %v1060, %v1032
    %v1065 = vsel %vm1057, %v1061, %v1039
    %v1066 = vsel %vm1058, %v1062, %v1046
    %vm1067 = vcmp.eq.s32.totalorder %v1063, 0
    %vm1068 = vcmp.eq.s32.totalorder %v1064, 0
    %vm1069 = vcmp.eq.s32.totalorder %v1065, 0
    %vm1070 = vcmp.eq.s32.totalorder %v1066, 0
    %v1071 = vrot.slane %v653, 7
    %v1072 = vrot.slane %v654, 7
    %v1073 = vrot.slane %v813, 7
    %v1074 = vrot.slane %v814, 7
    %vm1075 = vcmp.lt.s32.totalorder %v1015, 1
    %v1076 = vsel %vm1075, %v1073, %v1074
    %v1077 = vsel %vm1075, %v1072, %v1073
    %v1078 = vsel %vm1075, %v1071, %v1072
    %v1079 = vsel %vm1075, %v1074, %v1071
    %v1080 = vsel %vm1067, 1, 0
    %v1081 = vsel %vm1068, 1, 0
    %v1082 = vsel %vm1069, 1, 0
    %v1083 = vsel %vm1070, 1, 0
    %vm1084 = vcmp.eq.s32.totalorder %v1080, 1
    %vm1085 = vcmp.eq.s32.totalorder %v1081, 1
    %vm1086 = vcmp.eq.s32.totalorder %v1082, 1
    %vm1087 = vcmp.eq.s32.totalorder %v1083, 1
    %v1088 = vsel %vm1084, 0.0, %v1079
    %v1089 = vsel %vm1085, 0.0, %v1078
    %v1090 = vsel %vm1086, 0.0, %v1077
    %v1091 = vsel %vm1087, 0.0, %v1076
    %vm1092 = vcmp.eq.s32.totalorder %v1063, 15
    %vm1093 = vcmp.eq.s32.totalorder %v1064, 15
    %vm1094 = vcmp.eq.s32.totalorder %v1065, 15
    %vm1095 = vcmp.eq.s32.totalorder %v1066, 15
    %v1096 = vrot.slane %v653, 1
    %v1097 = vrot.slane %v654, 1
    %v1098 = vrot.slane %v813, 1
    %v1099 = vrot.slane %v814, 1
    %vm1100 = vcmp.lt.s32.totalorder %v1015, 7
    %v1101 = vsel %vm1100, %v1098, %v1099
    %v1102 = vsel %vm1100, %v1097, %v1098
    %v1103 = vsel %vm1100, %v1096, %v1097
    %v1104 = vsel %vm1100, %v1099, %v1096
    %v1105 = vsel %vm1092, 1, 0
    %v1106 = vsel %vm1093, 1, 0
    %v1107 = vsel %vm1094, 1, 0
    %v1108 = vsel %vm1095, 1, 0
    %vm1109 = vcmp.eq.s32.totalorder %v1105, 1
    %vm1110 = vcmp.eq.s32.totalorder %v1106, 1
    %vm1111 = vcmp.eq.s32.totalorder %v1107, 1
    %vm1112 = vcmp.eq.s32.totalorder %v1108, 1
    %v1113 = vsel %vm1109, 0.0, %v1103
    %v1114 = vsel %vm1110, 0.0, %v1102
    %v1115 = vsel %vm1111, 0.0, %v1101
    %v1116 = vsel %vm1112, 0.0, %v1104
    %v1117 = vpack.c.bf16 %v1089, %v1088
    %v1118 = vpack.c.bf16 %v654, %v653
    %v1119 = vpack.c.bf16 %v1114, %v1113
    %v1120 = vpack.c.bf16 %v1091, %v1090
    %v1121 = vpack.c.bf16 %v814, %v813
    %v1122 = vpack.c.bf16 %v1116, %v1115
    %v1123 = vld [vmem:[%s3] sm:$0xf]
    %v1124 = vld [vmem:[%s3 + $0x4] sm:$0xf]
    %v1125 = vld [vmem:[%s3 + $0x8] sm:$0xf]
    %v1126 = vld [vmem:[%s3 + $0xc] sm:$0xf]
    %v1127 = vld [vmem:[%s3 + $0x10] sm:$0xf]
    %v1128 = vld [vmem:[%s3 + $0x14] sm:$0xf]
    %v1129 = vld [vmem:[%s3 + $0x18] sm:$0xf]
    %v1130 = vld [vmem:[%s3 + $0x1c] sm:$0xf]
    %v1131 = vld [vmem:[%s3 + $0x20] sm:$0xf]
    %v1132 = vld [vmem:[%s3 + $0x24] sm:$0xf]
    %v1133 = vld [vmem:[%s3 + $0x28] sm:$0xf]
    %v1134 = vld [vmem:[%s3 + $0x2c] sm:$0xf]
    %v1135 = vld [vmem:[%s3 + $0x30] sm:$0xf]
    %v1136 = vld [vmem:[%s3 + $0x34] sm:$0xf]
    %v1137 = vld [vmem:[%s3 + $0x38] sm:$0xf]
    %v1138 = vld [vmem:[%s3 + $0x3c] sm:$0xf]
    %v1139 = vld [vmem:[%s3 + $0x40] sm:$0xf]
    %v1140 = vld [vmem:[%s3 + $0x44] sm:$0xf]
    %v1141 = vld [vmem:[%s3 + $0x48] sm:$0xf]
    %v1142 = vld [vmem:[%s3 + $0x4c] sm:$0xf]
    %v1143 = vld [vmem:[%s3 + $0x50] sm:$0xf]
    %v1144 = vld [vmem:[%s3 + $0x54] sm:$0xf]
    %v1145 = vld [vmem:[%s3 + $0x58] sm:$0xf]
    %v1146 = vld [vmem:[%s3 + $0x5c] sm:$0xf]
    %v1147 = vld [vmem:[%s3 + $0x60] sm:$0xf]
    %v1148 = vld [vmem:[%s3 + $0x64] sm:$0xf]
    %v1149 = vld [vmem:[%s3 + $0x68] sm:$0xf]
    %v1150 = vld [vmem:[%s3 + $0x6c] sm:$0xf]
    %v1151 = vld [vmem:[%s3 + $0x70] sm:$0xf]
    %v1152 = vld [vmem:[%s3 + $0x74] sm:$0xf]
    %v1153 = vld [vmem:[%s3 + $0x78] sm:$0xf]
    %v1154 = vld [vmem:[%s3 + $0x7c] sm:$0xf]
    %v1155 = vld [vmem:[%s3 + $0x80] sm:$0xf]
    %v1156 = vld [vmem:[%s3 + $0x84] sm:$0xf]
    %v1157 = vld [vmem:[%s3 + $0x88] sm:$0xf]
    %v1158 = vld [vmem:[%s3 + $0x8c] sm:$0xf]
    %v1159 = vld [vmem:[%s3 + $0x90] sm:$0xf]
    %v1160 = vld [vmem:[%s3 + $0x94] sm:$0xf]
    %v1161 = vld [vmem:[%s3 + $0x98] sm:$0xf]
    %v1162 = vld [vmem:[%s3 + $0x9c] sm:$0xf]
    %v1163 = vld [vmem:[%s3 + $0xa0] sm:$0xf]
    %v1164 = vld [vmem:[%s3 + $0xa4] sm:$0xf]
    %v1165 = vld [vmem:[%s3 + $0xa8] sm:$0xf]
    %v1166 = vld [vmem:[%s3 + $0xac] sm:$0xf]
    %v1167 = vld [vmem:[%s3 + $0xb0] sm:$0xf]
    %v1168 = vld [vmem:[%s3 + $0xb4] sm:$0xf]
    %v1169 = vld [vmem:[%s3 + $0xb8] sm:$0xf]
    %v1170 = vld [vmem:[%s3 + $0xbc] sm:$0xf]
    %v1171 = vld [vmem:[%s4] sm:$0x1]
    %v1173 = vperm.slane %v1171, 0
    %v1223 = vunpack.c.l.b16 %v1123
    %v1224 = vunpack.c.l.b16 %v1124
    %v1225 = vunpack.c.l.b16 %v1125
    %v1226 = vunpack.c.l.b16 %v1126
    %v1227 = vunpack.c.l.b16 %v1127
    %v1228 = vunpack.c.l.b16 %v1128
    %v1229 = vunpack.c.l.b16 %v1129
    %v1230 = vunpack.c.l.b16 %v1130
    %v1231 = vunpack.c.l.b16 %v1131
    %v1232 = vunpack.c.l.b16 %v1132
    %v1233 = vunpack.c.l.b16 %v1133
    %v1234 = vunpack.c.l.b16 %v1134
    %v1235 = vunpack.c.l.b16 %v1135
    %v1236 = vunpack.c.l.b16 %v1136
    %v1237 = vunpack.c.l.b16 %v1137
    %v1238 = vunpack.c.l.b16 %v1138
    %v1239 = vunpack.c.l.b16 %v1139
    %v1240 = vunpack.c.l.b16 %v1140
    %v1241 = vunpack.c.l.b16 %v1141
    %v1242 = vunpack.c.l.b16 %v1142
    %v1243 = vunpack.c.l.b16 %v1143
    %v1244 = vunpack.c.l.b16 %v1144
    %v1245 = vunpack.c.l.b16 %v1145
    %v1246 = vunpack.c.l.b16 %v1146
    %v1247 = vunpack.c.l.b16 %v1147
    %v1248 = vunpack.c.l.b16 %v1148
    %v1249 = vunpack.c.l.b16 %v1149
    %v1250 = vunpack.c.l.b16 %v1150
    %v1251 = vunpack.c.l.b16 %v1151
    %v1252 = vunpack.c.l.b16 %v1152
    %v1253 = vunpack.c.l.b16 %v1153
    %v1254 = vunpack.c.l.b16 %v1154
    %v1255 = vunpack.c.l.b16 %v1155
    %v1256 = vunpack.c.l.b16 %v1156
    %v1257 = vunpack.c.l.b16 %v1157
    %v1258 = vunpack.c.l.b16 %v1158
    %v1259 = vunpack.c.l.b16 %v1159
    %v1260 = vunpack.c.l.b16 %v1160
    %v1261 = vunpack.c.l.b16 %v1161
    %v1262 = vunpack.c.l.b16 %v1162
    %v1263 = vunpack.c.l.b16 %v1163
    %v1264 = vunpack.c.l.b16 %v1164
    %v1265 = vunpack.c.l.b16 %v1165
    %v1266 = vunpack.c.l.b16 %v1166
    %v1267 = vunpack.c.l.b16 %v1167
    %v1268 = vunpack.c.l.b16 %v1168
    %v1269 = vunpack.c.l.b16 %v1169
    %v1270 = vunpack.c.l.b16 %v1170
    %v1271 = vpack.c.b16 %v1224, %v1223
    %v1272 = vpack.c.b16 %v1226, %v1225
    %v1273 = vpack.c.b16 %v1228, %v1227
    %v1274 = vpack.c.b16 %v1230, %v1229
    %v1275 = vpack.c.b16 %v1232, %v1231
    %v1276 = vpack.c.b16 %v1234, %v1233
    %v1277 = vpack.c.b16 %v1236, %v1235
    %v1278 = vpack.c.b16 %v1238, %v1237
    %v1279 = vpack.c.b16 %v1240, %v1239
    %v1280 = vpack.c.b16 %v1242, %v1241
    %v1281 = vpack.c.b16 %v1244, %v1243
    %v1282 = vpack.c.b16 %v1246, %v1245
    %v1283 = vpack.c.b16 %v1248, %v1247
    %v1284 = vpack.c.b16 %v1250, %v1249
    %v1285 = vpack.c.b16 %v1252, %v1251
    %v1286 = vpack.c.b16 %v1254, %v1253
    %v1287 = vpack.c.b16 %v1256, %v1255
    %v1288 = vpack.c.b16 %v1258, %v1257
    %v1289 = vpack.c.b16 %v1260, %v1259
    %v1290 = vpack.c.b16 %v1262, %v1261
    %v1291 = vpack.c.b16 %v1264, %v1263
    %v1292 = vpack.c.b16 %v1266, %v1265
    %v1293 = vpack.c.b16 %v1268, %v1267
    %v1294 = vpack.c.b16 %v1270, %v1269
    %1319 = vmatpush.bf16.msra.mxu0 %v1278
    %1320 = vmatpush.bf16.msra.mxu0 %v1277
    %1321 = vmatpush.bf16.msra.mxu0 %v1276
    %1322 = vmatpush.bf16.msra.mxu0 %v1275
    %1323 = vmatpush.bf16.msra.mxu0 %v1274
    %1324 = vmatpush.bf16.msra.mxu0 %v1273
    %1325 = vmatpush.bf16.msra.mxu0 %v1272
    %1326 = vmatpush.bf16.msra.mxu0 %v1271
    %1327 = vmatmul.bf16.gmra.mxu0 %v1117
    %v1328 = vpop.f32.mrf.mxu0
    %v1329 = vadd.f32 %v1173, %v1328
    %v1330 = vpop.f32.mrf.mxu0
    %v1331 = vadd.f32 %v1173, %v1330
    %1332 = vmatmul.bf16.gmra.mxu0 %v1120
    %v1333 = vpop.f32.mrf.mxu0
    %v1334 = vadd.f32 %v1173, %v1333
    %v1335 = vpop.f32.mrf.mxu0
    %v1336 = vadd.f32 %v1173, %v1335
    %1337 = vdwg.mxu0
    %1338 = vmatpush.bf16.msra.mxu0 %v1286
    %1339 = vmatpush.bf16.msra.mxu0 %v1285
    %1340 = vmatpush.bf16.msra.mxu0 %v1284
    %1341 = vmatpush.bf16.msra.mxu0 %v1283
    %1342 = vmatpush.bf16.msra.mxu0 %v1282
    %1343 = vmatpush.bf16.msra.mxu0 %v1281
    %1344 = vmatpush.bf16.msra.mxu0 %v1280
    %1345 = vmatpush.bf16.msra.mxu0 %v1279
    %1346 = vmatmul.bf16.gmra.mxu0 %v1118
    %v1347 = vpop.f32.mrf.mxu0
    %v1348 = vadd.f32 %v1329, %v1347
    %v1349 = vpop.f32.mrf.mxu0
    %v1350 = vadd.f32 %v1331, %v1349
    %1351 = vmatmul.bf16.gmra.mxu0 %v1121
    %v1352 = vpop.f32.mrf.mxu0
    %v1353 = vadd.f32 %v1334, %v1352
    %v1354 = vpop.f32.mrf.mxu0
    %v1355 = vadd.f32 %v1336, %v1354
    %1356 = vdwg.mxu0
    %1357 = vmatpush.bf16.msra.mxu0 %v1294
    %1358 = vmatpush.bf16.msra.mxu0 %v1293
    %1359 = vmatpush.bf16.msra.mxu0 %v1292
    %1360 = vmatpush.bf16.msra.mxu0 %v1291
    %1361 = vmatpush.bf16.msra.mxu0 %v1290
    %1362 = vmatpush.bf16.msra.mxu0 %v1289
    %1363 = vmatpush.bf16.msra.mxu0 %v1288
    %1364 = vmatpush.bf16.msra.mxu0 %v1287
    %1365 = vmatmul.bf16.gmra.mxu0 %v1119
    %v1366 = vpop.f32.mrf.mxu0
    %v1367 = vadd.f32 %v1348, %v1366
    %v1368 = vpop.f32.mrf.mxu0
    %v1369 = vadd.f32 %v1350, %v1368
    %1370 = vmatmul.bf16.gmra.mxu0 %v1122
    %v1371 = vpop.f32.mrf.mxu0
    %v1372 = vadd.f32 %v1353, %v1371
    %v1373 = vpop.f32.mrf.mxu0
    %v1374 = vadd.f32 %v1355, %v1373
    %1375 = vdwg.mxu0
    %v1376 = vrot.slane %v972, 7
    %v1377 = vrot.slane %v979, 7
    %v1378 = vrot.slane %v1004, 7
    %v1379 = vrot.slane %v1011, 7
    %v1380 = vsel %vm1075, %v1378, %v1379
    %v1381 = vsel %vm1075, %v1377, %v1378
    %v1382 = vsel %vm1075, %v1376, %v1377
    %v1383 = vsel %vm1075, %v1379, %v1376
    %v1384 = vsel %vm1084, 0.0, %v1383
    %v1385 = vsel %vm1085, 0.0, %v1382
    %v1386 = vsel %vm1086, 0.0, %v1381
    %v1387 = vsel %vm1087, 0.0, %v1380
    %v1388 = vrot.slane %v972, 1
    %v1389 = vrot.slane %v979, 1
    %v1390 = vrot.slane %v1004, 1
    %v1391 = vrot.slane %v1011, 1
    %v1392 = vsel %vm1100, %v1390, %v1391
    %v1393 = vsel %vm1100, %v1389, %v1390
    %v1394 = vsel %vm1100, %v1388, %v1389
    %v1395 = vsel %vm1100, %v1391, %v1388
    %v1396 = vsel %vm1109, 0.0, %v1394
    %v1397 = vsel %vm1110, 0.0, %v1393
    %v1398 = vsel %vm1111, 0.0, %v1392
    %v1399 = vsel %vm1112, 0.0, %v1395
    %v1400 = vpack.c.bf16 %v1385, %v1384
    %v1401 = vpack.c.bf16 %v979, %v972
    %v1402 = vpack.c.bf16 %v1397, %v1396
    %v1403 = vpack.c.bf16 %v1387, %v1386
    %v1404 = vpack.c.bf16 %v1011, %v1004
    %v1405 = vpack.c.bf16 %v1399, %v1398
    %v1406 = vld [vmem:[#allocation2] sm:$0xf]
    %v1407 = vld [vmem:[#allocation2 + $0x4] sm:$0xf]
    %v1408 = vld [vmem:[#allocation2 + $0x8] sm:$0xf]
    %v1409 = vld [vmem:[#allocation2 + $0xc] sm:$0xf]
    %v1410 = vld [vmem:[#allocation2 + $0x10] sm:$0xf]
    %v1411 = vld [vmem:[#allocation2 + $0x14] sm:$0xf]
    %v1412 = vld [vmem:[#allocation2 + $0x18] sm:$0xf]
    %v1413 = vld [vmem:[#allocation2 + $0x1c] sm:$0xf]
    %v1414 = vld [vmem:[#allocation2 + $0x20] sm:$0xf]
    %v1415 = vld [vmem:[#allocation2 + $0x24] sm:$0xf]
    %v1416 = vld [vmem:[#allocation2 + $0x28] sm:$0xf]
    %v1417 = vld [vmem:[#allocation2 + $0x2c] sm:$0xf]
    %v1418 = vld [vmem:[#allocation2 + $0x30] sm:$0xf]
    %v1419 = vld [vmem:[#allocation2 + $0x34] sm:$0xf]
    %v1420 = vld [vmem:[#allocation2 + $0x38] sm:$0xf]
    %v1421 = vld [vmem:[#allocation2 + $0x3c] sm:$0xf]
    %v1422 = vld [vmem:[#allocation2 + $0x40] sm:$0xf]
    %v1423 = vld [vmem:[#allocation2 + $0x44] sm:$0xf]
    %v1424 = vld [vmem:[#allocation2 + $0x48] sm:$0xf]
    %v1425 = vld [vmem:[#allocation2 + $0x4c] sm:$0xf]
    %v1426 = vld [vmem:[#allocation2 + $0x50] sm:$0xf]
    %v1427 = vld [vmem:[#allocation2 + $0x54] sm:$0xf]
    %v1428 = vld [vmem:[#allocation2 + $0x58] sm:$0xf]
    %v1429 = vld [vmem:[#allocation2 + $0x5c] sm:$0xf]
    %v1430 = vld [vmem:[#allocation2 + $0x60] sm:$0xf]
    %v1431 = vld [vmem:[#allocation2 + $0x64] sm:$0xf]
    %v1432 = vld [vmem:[#allocation2 + $0x68] sm:$0xf]
    %v1433 = vld [vmem:[#allocation2 + $0x6c] sm:$0xf]
    %v1434 = vld [vmem:[#allocation2 + $0x70] sm:$0xf]
    %v1435 = vld [vmem:[#allocation2 + $0x74] sm:$0xf]
    %v1436 = vld [vmem:[#allocation2 + $0x78] sm:$0xf]
    %v1437 = vld [vmem:[#allocation2 + $0x7c] sm:$0xf]
    %v1438 = vld [vmem:[#allocation2 + $0x80] sm:$0xf]
    %v1439 = vld [vmem:[#allocation2 + $0x84] sm:$0xf]
    %v1440 = vld [vmem:[#allocation2 + $0x88] sm:$0xf]
    %v1441 = vld [vmem:[#allocation2 + $0x8c] sm:$0xf]
    %v1442 = vld [vmem:[#allocation2 + $0x90] sm:$0xf]
    %v1443 = vld [vmem:[#allocation2 + $0x94] sm:$0xf]
    %v1444 = vld [vmem:[#allocation2 + $0x98] sm:$0xf]
    %v1445 = vld [vmem:[#allocation2 + $0x9c] sm:$0xf]
    %v1446 = vld [vmem:[#allocation2 + $0xa0] sm:$0xf]
    %v1447 = vld [vmem:[#allocation2 + $0xa4] sm:$0xf]
    %v1448 = vld [vmem:[#allocation2 + $0xa8] sm:$0xf]
    %v1449 = vld [vmem:[#allocation2 + $0xac] sm:$0xf]
    %v1450 = vld [vmem:[#allocation2 + $0xb0] sm:$0xf]
    %v1451 = vld [vmem:[#allocation2 + $0xb4] sm:$0xf]
    %v1452 = vld [vmem:[#allocation2 + $0xb8] sm:$0xf]
    %v1453 = vld [vmem:[#allocation2 + $0xbc] sm:$0xf]
    %v1454 = vld [vmem:[%s6] sm:$0x1]
    %v1456 = vperm.slane %v1454, 0
    %v1506 = vunpack.c.l.b16 %v1406
    %v1507 = vunpack.c.l.b16 %v1407
    %v1508 = vunpack.c.l.b16 %v1408
    %v1509 = vunpack.c.l.b16 %v1409
    %v1510 = vunpack.c.l.b16 %v1410
    %v1511 = vunpack.c.l.b16 %v1411
    %v1512 = vunpack.c.l.b16 %v1412
    %v1513 = vunpack.c.l.b16 %v1413
    %v1514 = vunpack.c.l.b16 %v1414
    %v1515 = vunpack.c.l.b16 %v1415
    %v1516 = vunpack.c.l.b16 %v1416
    %v1517 = vunpack.c.l.b16 %v1417
    %v1518 = vunpack.c.l.b16 %v1418
    %v1519 = vunpack.c.l.b16 %v1419
    %v1520 = vunpack.c.l.b16 %v1420
    %v1521 = vunpack.c.l.b16 %v1421
    %v1522 = vunpack.c.l.b16 %v1422
    %v1523 = vunpack.c.l.b16 %v1423
    %v1524 = vunpack.c.l.b16 %v1424
    %v1525 = vunpack.c.l.b16 %v1425
    %v1526 = vunpack.c.l.b16 %v1426
    %v1527 = vunpack.c.l.b16 %v1427
    %v1528 = vunpack.c.l.b16 %v1428
    %v1529 = vunpack.c.l.b16 %v1429
    %v1530 = vunpack.c.l.b16 %v1430
    %v1531 = vunpack.c.l.b16 %v1431
    %v1532 = vunpack.c.l.b16 %v1432
    %v1533 = vunpack.c.l.b16 %v1433
    %v1534 = vunpack.c.l.b16 %v1434
    %v1535 = vunpack.c.l.b16 %v1435
    %v1536 = vunpack.c.l.b16 %v1436
    %v1537 = vunpack.c.l.b16 %v1437
    %v1538 = vunpack.c.l.b16 %v1438
    %v1539 = vunpack.c.l.b16 %v1439
    %v1540 = vunpack.c.l.b16 %v1440
    %v1541 = vunpack.c.l.b16 %v1441
    %v1542 = vunpack.c.l.b16 %v1442
    %v1543 = vunpack.c.l.b16 %v1443
    %v1544 = vunpack.c.l.b16 %v1444
    %v1545 = vunpack.c.l.b16 %v1445
    %v1546 = vunpack.c.l.b16 %v1446
    %v1547 = vunpack.c.l.b16 %v1447
    %v1548 = vunpack.c.l.b16 %v1448
    %v1549 = vunpack.c.l.b16 %v1449
    %v1550 = vunpack.c.l.b16 %v1450
    %v1551 = vunpack.c.l.b16 %v1451
    %v1552 = vunpack.c.l.b16 %v1452
    %v1553 = vunpack.c.l.b16 %v1453
    %v1554 = vpack.c.b16 %v1507, %v1506
    %v1555 = vpack.c.b16 %v1509, %v1508
    %v1556 = vpack.c.b16 %v1511, %v1510
    %v1557 = vpack.c.b16 %v1513, %v1512
    %v1558 = vpack.c.b16 %v1515, %v1514
    %v1559 = vpack.c.b16 %v1517, %v1516
    %v1560 = vpack.c.b16 %v1519, %v1518
    %v1561 = vpack.c.b16 %v1521, %v1520
    %v1562 = vpack.c.b16 %v1523, %v1522
    %v1563 = vpack.c.b16 %v1525, %v1524
    %v1564 = vpack.c.b16 %v1527, %v1526
    %v1565 = vpack.c.b16 %v1529, %v1528
    %v1566 = vpack.c.b16 %v1531, %v1530
    %v1567 = vpack.c.b16 %v1533, %v1532
    %v1568 = vpack.c.b16 %v1535, %v1534
    %v1569 = vpack.c.b16 %v1537, %v1536
    %v1570 = vpack.c.b16 %v1539, %v1538
    %v1571 = vpack.c.b16 %v1541, %v1540
    %v1572 = vpack.c.b16 %v1543, %v1542
    %v1573 = vpack.c.b16 %v1545, %v1544
    %v1574 = vpack.c.b16 %v1547, %v1546
    %v1575 = vpack.c.b16 %v1549, %v1548
    %v1576 = vpack.c.b16 %v1551, %v1550
    %v1577 = vpack.c.b16 %v1553, %v1552
    %1602 = vmatpush.bf16.msra.mxu0 %v1561
    %1603 = vmatpush.bf16.msra.mxu0 %v1560
    %1604 = vmatpush.bf16.msra.mxu0 %v1559
    %1605 = vmatpush.bf16.msra.mxu0 %v1558
    %1606 = vmatpush.bf16.msra.mxu0 %v1557
    %1607 = vmatpush.bf16.msra.mxu0 %v1556
    %1608 = vmatpush.bf16.msra.mxu0 %v1555
    %1609 = vmatpush.bf16.msra.mxu0 %v1554
    %1610 = vmatmul.bf16.gmra.mxu0 %v1400
    %v1611 = vpop.f32.mrf.mxu0
    %v1612 = vadd.f32 %v1456, %v1611
    %v1613 = vpop.f32.mrf.mxu0
    %v1614 = vadd.f32 %v1456, %v1613
    %1615 = vmatmul.bf16.gmra.mxu0 %v1403
    %v1616 = vpop.f32.mrf.mxu0
    %v1617 = vadd.f32 %v1456, %v1616
    %v1618 = vpop.f32.mrf.mxu0
    %v1619 = vadd.f32 %v1456, %v1618
    %1620 = vdwg.mxu0
    %1621 = vmatpush.bf16.msra.mxu0 %v1569
    %1622 = vmatpush.bf16.msra.mxu0 %v1568
    %1623 = vmatpush.bf16.msra.mxu0 %v1567
    %1624 = vmatpush.bf16.msra.mxu0 %v1566
    %1625 = vmatpush.bf16.msra.mxu0 %v1565
    %1626 = vmatpush.bf16.msra.mxu0 %v1564
    %1627 = vmatpush.bf16.msra.mxu0 %v1563
    %1628 = vmatpush.bf16.msra.mxu0 %v1562
    %1629 = vmatmul.bf16.gmra.mxu0 %v1401
    %v1630 = vpop.f32.mrf.mxu0
    %v1631 = vadd.f32 %v1612, %v1630
    %v1632 = vpop.f32.mrf.mxu0
    %v1633 = vadd.f32 %v1614, %v1632
    %1634 = vmatmul.bf16.gmra.mxu0 %v1404
    %v1635 = vpop.f32.mrf.mxu0
    %v1636 = vadd.f32 %v1617, %v1635
    %v1637 = vpop.f32.mrf.mxu0
    %v1638 = vadd.f32 %v1619, %v1637
    %1639 = vdwg.mxu0
    %1640 = vmatpush.bf16.msra.mxu0 %v1577
    %1641 = vmatpush.bf16.msra.mxu0 %v1576
    %1642 = vmatpush.bf16.msra.mxu0 %v1575
    %1643 = vmatpush.bf16.msra.mxu0 %v1574
    %1644 = vmatpush.bf16.msra.mxu0 %v1573
    %1645 = vmatpush.bf16.msra.mxu0 %v1572
    %1646 = vmatpush.bf16.msra.mxu0 %v1571
    %1647 = vmatpush.bf16.msra.mxu0 %v1570
    %1648 = vmatmul.bf16.gmra.mxu0 %v1402
    %v1649 = vpop.f32.mrf.mxu0
    %v1650 = vadd.f32 %v1631, %v1649
    %v1651 = vpop.f32.mrf.mxu0
    %v1652 = vadd.f32 %v1633, %v1651
    %1653 = vmatmul.bf16.gmra.mxu0 %v1405
    %v1654 = vpop.f32.mrf.mxu0
    %v1655 = vadd.f32 %v1636, %v1654
    %v1656 = vpop.f32.mrf.mxu0
    %v1657 = vadd.f32 %v1638, %v1656
    %1658 = vdwg.mxu0
    %v1661 = vrot.slane %v1650, 1
    %v1662 = vrot.slane %v1650, 2
    %v1663 = vrot.slane %v1650, 3
    %v1664 = vrot.slane %v1650, 4
    %v1665 = vrot.slane %v1650, 5
    %v1666 = vrot.slane %v1650, 6
    %v1667 = vrot.slane %v1650, 7
    %v1668 = vrot.slane %v1652, 1
    %v1669 = vrot.slane %v1652, 2
    %v1670 = vrot.slane %v1652, 3
    %v1671 = vrot.slane %v1652, 4
    %v1672 = vrot.slane %v1652, 5
    %v1673 = vrot.slane %v1652, 6
    %v1674 = vrot.slane %v1652, 7
    %v1675 = vperm.slane %v1650, 0
    %v1676 = vperm.slane %v1661, 0
    %v1677 = vperm.slane %v1662, 0
    %v1678 = vperm.slane %v1663, 0
    %v1679 = vperm.slane %v1664, 0
    %v1680 = vperm.slane %v1665, 0
    %v1681 = vperm.slane %v1666, 0
    %v1682 = vperm.slane %v1667, 0
    %v1683 = vperm.slane %v1652, 0
    %v1684 = vperm.slane %v1668, 0
    %v1685 = vperm.slane %v1669, 0
    %v1686 = vperm.slane %v1670, 0
    %v1687 = vperm.slane %v1671, 0
    %v1688 = vperm.slane %v1672, 0
    %v1689 = vperm.slane %v1673, 0
    %v1690 = vperm.slane %v1674, 0
    %v1707 = vadd.f32 %v1367, %v1675
    %v1708 = vadd.f32 %v1369, %v1675
    %v1709 = vadd.f32 %v1367, %v1676
    %v1710 = vadd.f32 %v1369, %v1676
    %v1711 = vadd.f32 %v1367, %v1677
    %v1712 = vadd.f32 %v1369, %v1677
    %v1713 = vadd.f32 %v1367, %v1678
    %v1714 = vadd.f32 %v1369, %v1678
    %v1715 = vadd.f32 %v1367, %v1679
    %v1716 = vadd.f32 %v1369, %v1679
    %v1717 = vadd.f32 %v1367, %v1680
    %v1718 = vadd.f32 %v1369, %v1680
    %v1719 = vadd.f32 %v1367, %v1681
    %v1720 = vadd.f32 %v1369, %v1681
    %v1721 = vadd.f32 %v1367, %v1682
    %v1722 = vadd.f32 %v1369, %v1682
    %v1723 = vadd.f32 %v1367, %v1683
    %v1724 = vadd.f32 %v1369, %v1683
    %v1725 = vadd.f32 %v1367, %v1684
    %v1726 = vadd.f32 %v1369, %v1684
    %v1727 = vadd.f32 %v1367, %v1685
    %v1728 = vadd.f32 %v1369, %v1685
    %v1729 = vadd.f32 %v1367, %v1686
    %v1730 = vadd.f32 %v1369, %v1686
    %v1731 = vadd.f32 %v1367, %v1687
    %v1732 = vadd.f32 %v1369, %v1687
    %v1733 = vadd.f32 %v1367, %v1688
    %v1734 = vadd.f32 %v1369, %v1688
    %v1735 = vadd.f32 %v1367, %v1689
    %v1736 = vadd.f32 %v1369, %v1689
    %v1737 = vadd.f32 %v1367, %v1690
    %v1738 = vadd.f32 %v1369, %v1690
    %v1739 = vmax.f32 %v1707, 0.0
    %v1740 = vmax.f32 %v1708, 0.0
    %v1741 = vmax.f32 %v1709, 0.0
    %v1742 = vmax.f32 %v1710, 0.0
    %v1743 = vmax.f32 %v1711, 0.0
    %v1744 = vmax.f32 %v1712, 0.0
    %v1745 = vmax.f32 %v1713, 0.0
    %v1746 = vmax.f32 %v1714, 0.0
    %v1747 = vmax.f32 %v1715, 0.0
    %v1748 = vmax.f32 %v1716, 0.0
    %v1749 = vmax.f32 %v1717, 0.0
    %v1750 = vmax.f32 %v1718, 0.0
    %v1751 = vmax.f32 %v1719, 0.0
    %v1752 = vmax.f32 %v1720, 0.0
    %v1753 = vmax.f32 %v1721, 0.0
    %v1754 = vmax.f32 %v1722, 0.0
    %v1755 = vmax.f32 %v1723, 0.0
    %v1756 = vmax.f32 %v1724, 0.0
    %v1757 = vmax.f32 %v1725, 0.0
    %v1758 = vmax.f32 %v1726, 0.0
    %v1759 = vmax.f32 %v1727, 0.0
    %v1760 = vmax.f32 %v1728, 0.0
    %v1761 = vmax.f32 %v1729, 0.0
    %v1762 = vmax.f32 %v1730, 0.0
    %v1763 = vmax.f32 %v1731, 0.0
    %v1764 = vmax.f32 %v1732, 0.0
    %v1765 = vmax.f32 %v1733, 0.0
    %v1766 = vmax.f32 %v1734, 0.0
    %v1767 = vmax.f32 %v1735, 0.0
    %v1768 = vmax.f32 %v1736, 0.0
    %v1769 = vmax.f32 %v1737, 0.0
    %v1770 = vmax.f32 %v1738, 0.0
    %v1771 = vpack.c.bf16 %v1739, %v1739
    %v1772 = vpack.c.bf16 %v1740, %v1740
    %v1773 = vpack.c.bf16 %v1741, %v1741
    %v1774 = vpack.c.bf16 %v1742, %v1742
    %v1775 = vpack.c.bf16 %v1743, %v1743
    %v1776 = vpack.c.bf16 %v1744, %v1744
    %v1777 = vpack.c.bf16 %v1745, %v1745
    %v1778 = vpack.c.bf16 %v1746, %v1746
    %v1779 = vpack.c.bf16 %v1747, %v1747
    %v1780 = vpack.c.bf16 %v1748, %v1748
    %v1781 = vpack.c.bf16 %v1749, %v1749
    %v1782 = vpack.c.bf16 %v1750, %v1750
    %v1783 = vpack.c.bf16 %v1751, %v1751
    %v1784 = vpack.c.bf16 %v1752, %v1752
    %v1785 = vpack.c.bf16 %v1753, %v1753
    %v1786 = vpack.c.bf16 %v1754, %v1754
    %v1787 = vpack.c.bf16 %v1755, %v1755
    %v1788 = vpack.c.bf16 %v1756, %v1756
    %v1789 = vpack.c.bf16 %v1757, %v1757
    %v1790 = vpack.c.bf16 %v1758, %v1758
    %v1791 = vpack.c.bf16 %v1759, %v1759
    %v1792 = vpack.c.bf16 %v1760, %v1760
    %v1793 = vpack.c.bf16 %v1761, %v1761
    %v1794 = vpack.c.bf16 %v1762, %v1762
    %v1795 = vpack.c.bf16 %v1763, %v1763
    %v1796 = vpack.c.bf16 %v1764, %v1764
    %v1797 = vpack.c.bf16 %v1765, %v1765
    %v1798 = vpack.c.bf16 %v1766, %v1766
    %v1799 = vpack.c.bf16 %v1767, %v1767
    %v1800 = vpack.c.bf16 %v1768, %v1768
    %v1801 = vpack.c.bf16 %v1769, %v1769
    %v1802 = vpack.c.bf16 %v1770, %v1770
    %v1805 = vrot.slane %v1655, 1
    %v1806 = vrot.slane %v1655, 2
    %v1807 = vrot.slane %v1655, 3
    %v1808 = vrot.slane %v1655, 4
    %v1809 = vrot.slane %v1655, 5
    %v1810 = vrot.slane %v1655, 6
    %v1811 = vrot.slane %v1655, 7
    %v1812 = vrot.slane %v1657, 1
    %v1813 = vrot.slane %v1657, 2
    %v1814 = vrot.slane %v1657, 3
    %v1815 = vrot.slane %v1657, 4
    %v1816 = vrot.slane %v1657, 5
    %v1817 = vrot.slane %v1657, 6
    %v1818 = vrot.slane %v1657, 7
    %v1819 = vperm.slane %v1655, 0
    %v1820 = vperm.slane %v1805, 0
    %v1821 = vperm.slane %v1806, 0
    %v1822 = vperm.slane %v1807, 0
    %v1823 = vperm.slane %v1808, 0
    %v1824 = vperm.slane %v1809, 0
    %v1825 = vperm.slane %v1810, 0
    %v1826 = vperm.slane %v1811, 0
    %v1827 = vperm.slane %v1657, 0
    %v1828 = vperm.slane %v1812, 0
    %v1829 = vperm.slane %v1813, 0
    %v1830 = vperm.slane %v1814, 0
    %v1831 = vperm.slane %v1815, 0
    %v1832 = vperm.slane %v1816, 0
    %v1833 = vperm.slane %v1817, 0
    %v1834 = vperm.slane %v1818, 0
    %v1851 = vadd.f32 %v1372, %v1819
    %v1852 = vadd.f32 %v1374, %v1819
    %v1853 = vadd.f32 %v1372, %v1820
    %v1854 = vadd.f32 %v1374, %v1820
    %v1855 = vadd.f32 %v1372, %v1821
    %v1856 = vadd.f32 %v1374, %v1821
    %v1857 = vadd.f32 %v1372, %v1822
    %v1858 = vadd.f32 %v1374, %v1822
    %v1859 = vadd.f32 %v1372, %v1823
    %v1860 = vadd.f32 %v1374, %v1823
    %v1861 = vadd.f32 %v1372, %v1824
    %v1862 = vadd.f32 %v1374, %v1824
    %v1863 = vadd.f32 %v1372, %v1825
    %v1864 = vadd.f32 %v1374, %v1825
    %v1865 = vadd.f32 %v1372, %v1826
    %v1866 = vadd.f32 %v1374, %v1826
    %v1867 = vadd.f32 %v1372, %v1827
    %v1868 = vadd.f32 %v1374, %v1827
    %v1869 = vadd.f32 %v1372, %v1828
    %v1870 = vadd.f32 %v1374, %v1828
    %v1871 = vadd.f32 %v1372, %v1829
    %v1872 = vadd.f32 %v1374, %v1829
    %v1873 = vadd.f32 %v1372, %v1830
    %v1874 = vadd.f32 %v1374, %v1830
    %v1875 = vadd.f32 %v1372, %v1831
    %v1876 = vadd.f32 %v1374, %v1831
    %v1877 = vadd.f32 %v1372, %v1832
    %v1878 = vadd.f32 %v1374, %v1832
    %v1879 = vadd.f32 %v1372, %v1833
    %v1880 = vadd.f32 %v1374, %v1833
    %v1881 = vadd.f32 %v1372, %v1834
    %v1882 = vadd.f32 %v1374, %v1834
    %v1883 = vmax.f32 %v1851, 0.0
    %v1884 = vmax.f32 %v1852, 0.0
    %v1885 = vmax.f32 %v1853, 0.0
    %v1886 = vmax.f32 %v1854, 0.0
    %v1887 = vmax.f32 %v1855, 0.0
    %v1888 = vmax.f32 %v1856, 0.0
    %v1889 = vmax.f32 %v1857, 0.0
    %v1890 = vmax.f32 %v1858, 0.0
    %v1891 = vmax.f32 %v1859, 0.0
    %v1892 = vmax.f32 %v1860, 0.0
    %v1893 = vmax.f32 %v1861, 0.0
    %v1894 = vmax.f32 %v1862, 0.0
    %v1895 = vmax.f32 %v1863, 0.0
    %v1896 = vmax.f32 %v1864, 0.0
    %v1897 = vmax.f32 %v1865, 0.0
    %v1898 = vmax.f32 %v1866, 0.0
    %v1899 = vmax.f32 %v1867, 0.0
    %v1900 = vmax.f32 %v1868, 0.0
    %v1901 = vmax.f32 %v1869, 0.0
    %v1902 = vmax.f32 %v1870, 0.0
    %v1903 = vmax.f32 %v1871, 0.0
    %v1904 = vmax.f32 %v1872, 0.0
    %v1905 = vmax.f32 %v1873, 0.0
    %v1906 = vmax.f32 %v1874, 0.0
    %v1907 = vmax.f32 %v1875, 0.0
    %v1908 = vmax.f32 %v1876, 0.0
    %v1909 = vmax.f32 %v1877, 0.0
    %v1910 = vmax.f32 %v1878, 0.0
    %v1911 = vmax.f32 %v1879, 0.0
    %v1912 = vmax.f32 %v1880, 0.0
    %v1913 = vmax.f32 %v1881, 0.0
    %v1914 = vmax.f32 %v1882, 0.0
    %v1915 = vpack.c.bf16 %v1883, %v1883
    %v1916 = vpack.c.bf16 %v1884, %v1884
    %v1917 = vpack.c.bf16 %v1885, %v1885
    %v1918 = vpack.c.bf16 %v1886, %v1886
    %v1919 = vpack.c.bf16 %v1887, %v1887
    %v1920 = vpack.c.bf16 %v1888, %v1888
    %v1921 = vpack.c.bf16 %v1889, %v1889
    %v1922 = vpack.c.bf16 %v1890, %v1890
    %v1923 = vpack.c.bf16 %v1891, %v1891
    %v1924 = vpack.c.bf16 %v1892, %v1892
    %v1925 = vpack.c.bf16 %v1893, %v1893
    %v1926 = vpack.c.bf16 %v1894, %v1894
    %v1927 = vpack.c.bf16 %v1895, %v1895
    %v1928 = vpack.c.bf16 %v1896, %v1896
    %v1929 = vpack.c.bf16 %v1897, %v1897
    %v1930 = vpack.c.bf16 %v1898, %v1898
    %v1931 = vpack.c.bf16 %v1899, %v1899
    %v1932 = vpack.c.bf16 %v1900, %v1900
    %v1933 = vpack.c.bf16 %v1901, %v1901
    %v1934 = vpack.c.bf16 %v1902, %v1902
    %v1935 = vpack.c.bf16 %v1903, %v1903
    %v1936 = vpack.c.bf16 %v1904, %v1904
    %v1937 = vpack.c.bf16 %v1905, %v1905
    %v1938 = vpack.c.bf16 %v1906, %v1906
    %v1939 = vpack.c.bf16 %v1907, %v1907
    %v1940 = vpack.c.bf16 %v1908, %v1908
    %v1941 = vpack.c.bf16 %v1909, %v1909
    %v1942 = vpack.c.bf16 %v1910, %v1910
    %v1943 = vpack.c.bf16 %v1911, %v1911
    %v1944 = vpack.c.bf16 %v1912, %v1912
    %v1945 = vpack.c.bf16 %v1913, %v1913
    %v1946 = vpack.c.bf16 %v1914, %v1914
    %v1979 = vunpack.c.l.b16 %v1771
    %v1980 = vunpack.c.l.b16 %v1772
    %v1981 = vunpack.c.l.b16 %v1773
    %v1982 = vunpack.c.l.b16 %v1774
    %v1983 = vunpack.c.l.b16 %v1775
    %v1984 = vunpack.c.l.b16 %v1776
    %v1985 = vunpack.c.l.b16 %v1777
    %v1986 = vunpack.c.l.b16 %v1778
    %v1987 = vunpack.c.l.b16 %v1779
    %v1988 = vunpack.c.l.b16 %v1780
    %v1989 = vunpack.c.l.b16 %v1781
    %v1990 = vunpack.c.l.b16 %v1782
    %v1991 = vunpack.c.l.b16 %v1783
    %v1992 = vunpack.c.l.b16 %v1784
    %v1993 = vunpack.c.l.b16 %v1785
    %v1994 = vunpack.c.l.b16 %v1786
    %v1995 = vunpack.c.l.b16 %v1787
    %v1996 = vunpack.c.l.b16 %v1788
    %v1997 = vunpack.c.l.b16 %v1789
    %v1998 = vunpack.c.l.b16 %v1790
    %v1999 = vunpack.c.l.b16 %v1791
    %v2000 = vunpack.c.l.b16 %v1792
    %v2001 = vunpack.c.l.b16 %v1793
    %v2002 = vunpack.c.l.b16 %v1794
    %v2003 = vunpack.c.l.b16 %v1795
    %v2004 = vunpack.c.l.b16 %v1796
    %v2005 = vunpack.c.l.b16 %v1797
    %v2006 = vunpack.c.l.b16 %v1798
    %v2007 = vunpack.c.l.b16 %v1799
    %v2008 = vunpack.c.l.b16 %v1800
    %v2009 = vunpack.c.l.b16 %v1801
    %v2010 = vunpack.c.l.b16 %v1802
    %v2011 = vpack.c.b16 %v1980, %v1979
    %v2012 = vpack.c.b16 %v1982, %v1981
    %v2013 = vpack.c.b16 %v1984, %v1983
    %v2014 = vpack.c.b16 %v1986, %v1985
    %v2015 = vpack.c.b16 %v1988, %v1987
    %v2016 = vpack.c.b16 %v1990, %v1989
    %v2017 = vpack.c.b16 %v1992, %v1991
    %v2018 = vpack.c.b16 %v1994, %v1993
    %v2019 = vpack.c.b16 %v1996, %v1995
    %v2020 = vpack.c.b16 %v1998, %v1997
    %v2021 = vpack.c.b16 %v2000, %v1999
    %v2022 = vpack.c.b16 %v2002, %v2001
    %v2023 = vpack.c.b16 %v2004, %v2003
    %v2024 = vpack.c.b16 %v2006, %v2005
    %v2025 = vpack.c.b16 %v2008, %v2007
    %v2026 = vpack.c.b16 %v2010, %v2009
    %v2075 = vunpack.c.l.b16 %v1915
    %v2076 = vunpack.c.l.b16 %v1916
    %v2077 = vunpack.c.l.b16 %v1917
    %v2078 = vunpack.c.l.b16 %v1918
    %v2079 = vunpack.c.l.b16 %v1919
    %v2080 = vunpack.c.l.b16 %v1920
    %v2081 = vunpack.c.l.b16 %v1921
    %v2082 = vunpack.c.l.b16 %v1922
    %v2083 = vunpack.c.l.b16 %v1923
    %v2084 = vunpack.c.l.b16 %v1924
    %v2085 = vunpack.c.l.b16 %v1925
    %v2086 = vunpack.c.l.b16 %v1926
    %v2087 = vunpack.c.l.b16 %v1927
    %v2088 = vunpack.c.l.b16 %v1928
    %v2089 = vunpack.c.l.b16 %v1929
    %v2090 = vunpack.c.l.b16 %v1930
    %v2091 = vunpack.c.l.b16 %v1931
    %v2092 = vunpack.c.l.b16 %v1932
    %v2093 = vunpack.c.l.b16 %v1933
    %v2094 = vunpack.c.l.b16 %v1934
    %v2095 = vunpack.c.l.b16 %v1935
    %v2096 = vunpack.c.l.b16 %v1936
    %v2097 = vunpack.c.l.b16 %v1937
    %v2098 = vunpack.c.l.b16 %v1938
    %v2099 = vunpack.c.l.b16 %v1939
    %v2100 = vunpack.c.l.b16 %v1940
    %v2101 = vunpack.c.l.b16 %v1941
    %v2102 = vunpack.c.l.b16 %v1942
    %v2103 = vunpack.c.l.b16 %v1943
    %v2104 = vunpack.c.l.b16 %v1944
    %v2105 = vunpack.c.l.b16 %v1945
    %v2106 = vunpack.c.l.b16 %v1946
    %v2107 = vpack.c.b16 %v2076, %v2075
    %v2108 = vpack.c.b16 %v2078, %v2077
    %v2109 = vpack.c.b16 %v2080, %v2079
    %v2110 = vpack.c.b16 %v2082, %v2081
    %v2111 = vpack.c.b16 %v2084, %v2083
    %v2112 = vpack.c.b16 %v2086, %v2085
    %v2113 = vpack.c.b16 %v2088, %v2087
    %v2114 = vpack.c.b16 %v2090, %v2089
    %v2115 = vpack.c.b16 %v2092, %v2091
    %v2116 = vpack.c.b16 %v2094, %v2093
    %v2117 = vpack.c.b16 %v2096, %v2095
    %v2118 = vpack.c.b16 %v2098, %v2097
    %v2119 = vpack.c.b16 %v2100, %v2099
    %v2120 = vpack.c.b16 %v2102, %v2101
    %v2121 = vpack.c.b16 %v2104, %v2103
    %v2122 = vpack.c.b16 %v2106, %v2105
    %v2139 = vld [vmem:[%s7] sm:$0xf]
    %v2140 = vld [vmem:[%s7 + $0x4] sm:$0xf]
    %v2141 = vld [vmem:[%s7 + $0x8] sm:$0xf]
    %v2142 = vld [vmem:[%s7 + $0xc] sm:$0xf]
    %v2143 = vld [vmem:[%s7 + $0x10] sm:$0xf]
    %v2144 = vld [vmem:[%s7 + $0x14] sm:$0xf]
    %v2145 = vld [vmem:[%s7 + $0x18] sm:$0xf]
    %v2146 = vld [vmem:[%s7 + $0x1c] sm:$0xf]
    %v2147 = vld [vmem:[%s7 + $0x20] sm:$0xf]
    %v2148 = vld [vmem:[%s7 + $0x24] sm:$0xf]
    %v2149 = vld [vmem:[%s7 + $0x28] sm:$0xf]
    %v2150 = vld [vmem:[%s7 + $0x2c] sm:$0xf]
    %v2151 = vld [vmem:[%s7 + $0x30] sm:$0xf]
    %v2152 = vld [vmem:[%s7 + $0x34] sm:$0xf]
    %v2153 = vld [vmem:[%s7 + $0x38] sm:$0xf]
    %v2154 = vld [vmem:[%s7 + $0x3c] sm:$0xf]
    %v2155 = vld [vmem:[%s8] sm:$0x1]
    %v2157 = vperm.slane %v2155, 0
    %v2175 = vunpack.c.l.b16 %v2139
    %v2176 = vunpack.c.l.b16 %v2140
    %v2177 = vunpack.c.l.b16 %v2141
    %v2178 = vunpack.c.l.b16 %v2142
    %v2179 = vunpack.c.l.b16 %v2143
    %v2180 = vunpack.c.l.b16 %v2144
    %v2181 = vunpack.c.l.b16 %v2145
    %v2182 = vunpack.c.l.b16 %v2146
    %v2183 = vunpack.c.l.b16 %v2147
    %v2184 = vunpack.c.l.b16 %v2148
    %v2185 = vunpack.c.l.b16 %v2149
    %v2186 = vunpack.c.l.b16 %v2150
    %v2187 = vunpack.c.l.b16 %v2151
    %v2188 = vunpack.c.l.b16 %v2152
    %v2189 = vunpack.c.l.b16 %v2153
    %v2190 = vunpack.c.l.b16 %v2154
    %v2191 = vpack.c.b16 %v2176, %v2175
    %v2192 = vpack.c.b16 %v2178, %v2177
    %v2193 = vpack.c.b16 %v2180, %v2179
    %v2194 = vpack.c.b16 %v2182, %v2181
    %v2195 = vpack.c.b16 %v2184, %v2183
    %v2196 = vpack.c.b16 %v2186, %v2185
    %v2197 = vpack.c.b16 %v2188, %v2187
    %v2198 = vpack.c.b16 %v2190, %v2189
    %2207 = vmatpush.bf16.msra.mxu0 %v2198
    %2208 = vmatpush.bf16.msra.mxu0 %v2197
    %2209 = vmatpush.bf16.msra.mxu0 %v2196
    %2210 = vmatpush.bf16.msra.mxu0 %v2195
    %2211 = vmatpush.bf16.msra.mxu0 %v2194
    %2212 = vmatpush.bf16.msra.mxu0 %v2193
    %2213 = vmatpush.bf16.msra.mxu0 %v2192
    %2214 = vmatpush.bf16.msra.mxu0 %v2191
    %2215 = vmatmul.bf16.gmra.mxu0 %v2011
    %v2216 = vpop.f32.mrf.mxu0
    %v2217 = vadd.f32 %v2157, %v2216
    %v2218 = vpop.f32.mrf.mxu0
    %v2219 = vadd.f32 %v2157, %v2218
    %2220 = vmatmul.bf16.gmra.mxu0 %v2012
    %v2221 = vpop.f32.mrf.mxu0
    %v2222 = vadd.f32 %v2157, %v2221
    %v2223 = vpop.f32.mrf.mxu0
    %v2224 = vadd.f32 %v2157, %v2223
    %2225 = vmatmul.bf16.gmra.mxu0 %v2013
    %v2226 = vpop.f32.mrf.mxu0
    %v2227 = vadd.f32 %v2157, %v2226
    %v2228 = vpop.f32.mrf.mxu0
    %v2229 = vadd.f32 %v2157, %v2228
    %2230 = vmatmul.bf16.gmra.mxu0 %v2014
    %v2231 = vpop.f32.mrf.mxu0
    %v2232 = vadd.f32 %v2157, %v2231
    %v2233 = vpop.f32.mrf.mxu0
    %v2234 = vadd.f32 %v2157, %v2233
    %2235 = vmatmul.bf16.gmra.mxu0 %v2015
    %v2236 = vpop.f32.mrf.mxu0
    %v2237 = vadd.f32 %v2157, %v2236
    %v2238 = vpop.f32.mrf.mxu0
    %v2239 = vadd.f32 %v2157, %v2238
    %2240 = vmatmul.bf16.gmra.mxu0 %v2016
    %v2241 = vpop.f32.mrf.mxu0
    %v2242 = vadd.f32 %v2157, %v2241
    %v2243 = vpop.f32.mrf.mxu0
    %v2244 = vadd.f32 %v2157, %v2243
    %2245 = vmatmul.bf16.gmra.mxu0 %v2017
    %v2246 = vpop.f32.mrf.mxu0
    %v2247 = vadd.f32 %v2157, %v2246
    %v2248 = vpop.f32.mrf.mxu0
    %v2249 = vadd.f32 %v2157, %v2248
    %2250 = vmatmul.bf16.gmra.mxu0 %v2018
    %v2251 = vpop.f32.mrf.mxu0
    %v2252 = vadd.f32 %v2157, %v2251
    %v2253 = vpop.f32.mrf.mxu0
    %v2254 = vadd.f32 %v2157, %v2253
    %2255 = vmatmul.bf16.gmra.mxu0 %v2019
    %v2256 = vpop.f32.mrf.mxu0
    %v2257 = vadd.f32 %v2157, %v2256
    %v2258 = vpop.f32.mrf.mxu0
    %v2259 = vadd.f32 %v2157, %v2258
    %2260 = vmatmul.bf16.gmra.mxu0 %v2020
    %v2261 = vpop.f32.mrf.mxu0
    %v2262 = vadd.f32 %v2157, %v2261
    %v2263 = vpop.f32.mrf.mxu0
    %v2264 = vadd.f32 %v2157, %v2263
    %2265 = vmatmul.bf16.gmra.mxu0 %v2021
    %v2266 = vpop.f32.mrf.mxu0
    %v2267 = vadd.f32 %v2157, %v2266
    %v2268 = vpop.f32.mrf.mxu0
    %v2269 = vadd.f32 %v2157, %v2268
    %2270 = vmatmul.bf16.gmra.mxu0 %v2022
    %v2271 = vpop.f32.mrf.mxu0
    %v2272 = vadd.f32 %v2157, %v2271
    %v2273 = vpop.f32.mrf.mxu0
    %v2274 = vadd.f32 %v2157, %v2273
    %2275 = vmatmul.bf16.gmra.mxu0 %v2023
    %v2276 = vpop.f32.mrf.mxu0
    %v2277 = vadd.f32 %v2157, %v2276
    %v2278 = vpop.f32.mrf.mxu0
    %v2279 = vadd.f32 %v2157, %v2278
    %2280 = vmatmul.bf16.gmra.mxu0 %v2024
    %v2281 = vpop.f32.mrf.mxu0
    %v2282 = vadd.f32 %v2157, %v2281
    %v2283 = vpop.f32.mrf.mxu0
    %v2284 = vadd.f32 %v2157, %v2283
    %2285 = vmatmul.bf16.gmra.mxu0 %v2025
    %v2286 = vpop.f32.mrf.mxu0
    %v2287 = vadd.f32 %v2157, %v2286
    %v2288 = vpop.f32.mrf.mxu0
    %v2289 = vadd.f32 %v2157, %v2288
    %2290 = vmatmul.bf16.gmra.mxu0 %v2026
    %v2291 = vpop.f32.mrf.mxu0
    %v2292 = vadd.f32 %v2157, %v2291
    %v2293 = vpop.f32.mrf.mxu0
    %v2294 = vadd.f32 %v2157, %v2293
    %2295 = vmatmul.bf16.gmra.mxu0 %v2107
    %v2296 = vpop.f32.mrf.mxu0
    %v2297 = vadd.f32 %v2157, %v2296
    %v2298 = vpop.f32.mrf.mxu0
    %v2299 = vadd.f32 %v2157, %v2298
    %2300 = vmatmul.bf16.gmra.mxu0 %v2108
    %v2301 = vpop.f32.mrf.mxu0
    %v2302 = vadd.f32 %v2157, %v2301
    %v2303 = vpop.f32.mrf.mxu0
    %v2304 = vadd.f32 %v2157, %v2303
    %2305 = vmatmul.bf16.gmra.mxu0 %v2109
    %v2306 = vpop.f32.mrf.mxu0
    %v2307 = vadd.f32 %v2157, %v2306
    %v2308 = vpop.f32.mrf.mxu0
    %v2309 = vadd.f32 %v2157, %v2308
    %2310 = vmatmul.bf16.gmra.mxu0 %v2110
    %v2311 = vpop.f32.mrf.mxu0
    %v2312 = vadd.f32 %v2157, %v2311
    %v2313 = vpop.f32.mrf.mxu0
    %v2314 = vadd.f32 %v2157, %v2313
    %2315 = vmatmul.bf16.gmra.mxu0 %v2111
    %v2316 = vpop.f32.mrf.mxu0
    %v2317 = vadd.f32 %v2157, %v2316
    %v2318 = vpop.f32.mrf.mxu0
    %v2319 = vadd.f32 %v2157, %v2318
    %2320 = vmatmul.bf16.gmra.mxu0 %v2112
    %v2321 = vpop.f32.mrf.mxu0
    %v2322 = vadd.f32 %v2157, %v2321
    %v2323 = vpop.f32.mrf.mxu0
    %v2324 = vadd.f32 %v2157, %v2323
    %2325 = vmatmul.bf16.gmra.mxu0 %v2113
    %v2326 = vpop.f32.mrf.mxu0
    %v2327 = vadd.f32 %v2157, %v2326
    %v2328 = vpop.f32.mrf.mxu0
    %v2329 = vadd.f32 %v2157, %v2328
    %2330 = vmatmul.bf16.gmra.mxu0 %v2114
    %v2331 = vpop.f32.mrf.mxu0
    %v2332 = vadd.f32 %v2157, %v2331
    %v2333 = vpop.f32.mrf.mxu0
    %v2334 = vadd.f32 %v2157, %v2333
    %2335 = vmatmul.bf16.gmra.mxu0 %v2115
    %v2336 = vpop.f32.mrf.mxu0
    %v2337 = vadd.f32 %v2157, %v2336
    %v2338 = vpop.f32.mrf.mxu0
    %v2339 = vadd.f32 %v2157, %v2338
    %2340 = vmatmul.bf16.gmra.mxu0 %v2116
    %v2341 = vpop.f32.mrf.mxu0
    %v2342 = vadd.f32 %v2157, %v2341
    %v2343 = vpop.f32.mrf.mxu0
    %v2344 = vadd.f32 %v2157, %v2343
    %2345 = vmatmul.bf16.gmra.mxu0 %v2117
    %v2346 = vpop.f32.mrf.mxu0
    %v2347 = vadd.f32 %v2157, %v2346
    %v2348 = vpop.f32.mrf.mxu0
    %v2349 = vadd.f32 %v2157, %v2348
    %2350 = vmatmul.bf16.gmra.mxu0 %v2118
    %v2351 = vpop.f32.mrf.mxu0
    %v2352 = vadd.f32 %v2157, %v2351
    %v2353 = vpop.f32.mrf.mxu0
    %v2354 = vadd.f32 %v2157, %v2353
    %2355 = vmatmul.bf16.gmra.mxu0 %v2119
    %v2356 = vpop.f32.mrf.mxu0
    %v2357 = vadd.f32 %v2157, %v2356
    %v2358 = vpop.f32.mrf.mxu0
    %v2359 = vadd.f32 %v2157, %v2358
    %2360 = vmatmul.bf16.gmra.mxu0 %v2120
    %v2361 = vpop.f32.mrf.mxu0
    %v2362 = vadd.f32 %v2157, %v2361
    %v2363 = vpop.f32.mrf.mxu0
    %v2364 = vadd.f32 %v2157, %v2363
    %2365 = vmatmul.bf16.gmra.mxu0 %v2121
    %v2366 = vpop.f32.mrf.mxu0
    %v2367 = vadd.f32 %v2157, %v2366
    %v2368 = vpop.f32.mrf.mxu0
    %v2369 = vadd.f32 %v2157, %v2368
    %2370 = vmatmul.bf16.gmra.mxu0 %v2122
    %v2371 = vpop.f32.mrf.mxu0
    %v2372 = vadd.f32 %v2157, %v2371
    %v2373 = vpop.f32.mrf.mxu0
    %v2374 = vadd.f32 %v2157, %v2373
    %2375 = vdwg.mxu0
    %v2376 = vmax.f32 %v2217, 0.0
    %v2377 = vmax.f32 %v2219, 0.0
    %v2378 = vmax.f32 %v2222, 0.0
    %v2379 = vmax.f32 %v2224, 0.0
    %v2380 = vmax.f32 %v2227, 0.0
    %v2381 = vmax.f32 %v2229, 0.0
    %v2382 = vmax.f32 %v2232, 0.0
    %v2383 = vmax.f32 %v2234, 0.0
    %v2384 = vmax.f32 %v2237, 0.0
    %v2385 = vmax.f32 %v2239, 0.0
    %v2386 = vmax.f32 %v2242, 0.0
    %v2387 = vmax.f32 %v2244, 0.0
    %v2388 = vmax.f32 %v2247, 0.0
    %v2389 = vmax.f32 %v2249, 0.0
    %v2390 = vmax.f32 %v2252, 0.0
    %v2391 = vmax.f32 %v2254, 0.0
    %v2392 = vmax.f32 %v2257, 0.0
    %v2393 = vmax.f32 %v2259, 0.0
    %v2394 = vmax.f32 %v2262, 0.0
    %v2395 = vmax.f32 %v2264, 0.0
    %v2396 = vmax.f32 %v2267, 0.0
    %v2397 = vmax.f32 %v2269, 0.0
    %v2398 = vmax.f32 %v2272, 0.0
    %v2399 = vmax.f32 %v2274, 0.0
    %v2400 = vmax.f32 %v2277, 0.0
    %v2401 = vmax.f32 %v2279, 0.0
    %v2402 = vmax.f32 %v2282, 0.0
    %v2403 = vmax.f32 %v2284, 0.0
    %v2404 = vmax.f32 %v2287, 0.0
    %v2405 = vmax.f32 %v2289, 0.0
    %v2406 = vmax.f32 %v2292, 0.0
    %v2407 = vmax.f32 %v2294, 0.0
    %v2408 = vmax.f32 %v2297, 0.0
    %v2409 = vmax.f32 %v2299, 0.0
    %v2410 = vmax.f32 %v2302, 0.0
    %v2411 = vmax.f32 %v2304, 0.0
    %v2412 = vmax.f32 %v2307, 0.0
    %v2413 = vmax.f32 %v2309, 0.0
    %v2414 = vmax.f32 %v2312, 0.0
    %v2415 = vmax.f32 %v2314, 0.0
    %v2416 = vmax.f32 %v2317, 0.0
    %v2417 = vmax.f32 %v2319, 0.0
    %v2418 = vmax.f32 %v2322, 0.0
    %v2419 = vmax.f32 %v2324, 0.0
    %v2420 = vmax.f32 %v2327, 0.0
    %v2421 = vmax.f32 %v2329, 0.0
    %v2422 = vmax.f32 %v2332, 0.0
    %v2423 = vmax.f32 %v2334, 0.0
    %v2424 = vmax.f32 %v2337, 0.0
    %v2425 = vmax.f32 %v2339, 0.0
    %v2426 = vmax.f32 %v2342, 0.0
    %v2427 = vmax.f32 %v2344, 0.0
    %v2428 = vmax.f32 %v2347, 0.0
    %v2429 = vmax.f32 %v2349, 0.0
    %v2430 = vmax.f32 %v2352, 0.0
    %v2431 = vmax.f32 %v2354, 0.0
    %v2432 = vmax.f32 %v2357, 0.0
    %v2433 = vmax.f32 %v2359, 0.0
    %v2434 = vmax.f32 %v2362, 0.0
    %v2435 = vmax.f32 %v2364, 0.0
    %v2436 = vmax.f32 %v2367, 0.0
    %v2437 = vmax.f32 %v2369, 0.0
    %v2438 = vmax.f32 %v2372, 0.0
    %v2439 = vmax.f32 %v2374, 0.0
    %v2440 = vpack.c.bf16 %v2376, %v2376
    %v2441 = vpack.c.bf16 %v2377, %v2377
    %v2442 = vpack.c.bf16 %v2378, %v2378
    %v2443 = vpack.c.bf16 %v2379, %v2379
    %v2444 = vpack.c.bf16 %v2380, %v2380
    %v2445 = vpack.c.bf16 %v2381, %v2381
    %v2446 = vpack.c.bf16 %v2382, %v2382
    %v2447 = vpack.c.bf16 %v2383, %v2383
    %v2448 = vpack.c.bf16 %v2384, %v2384
    %v2449 = vpack.c.bf16 %v2385, %v2385
    %v2450 = vpack.c.bf16 %v2386, %v2386
    %v2451 = vpack.c.bf16 %v2387, %v2387
    %v2452 = vpack.c.bf16 %v2388, %v2388
    %v2453 = vpack.c.bf16 %v2389, %v2389
    %v2454 = vpack.c.bf16 %v2390, %v2390
    %v2455 = vpack.c.bf16 %v2391, %v2391
    %v2456 = vpack.c.bf16 %v2392, %v2392
    %v2457 = vpack.c.bf16 %v2393, %v2393
    %v2458 = vpack.c.bf16 %v2394, %v2394
    %v2459 = vpack.c.bf16 %v2395, %v2395
    %v2460 = vpack.c.bf16 %v2396, %v2396
    %v2461 = vpack.c.bf16 %v2397, %v2397
    %v2462 = vpack.c.bf16 %v2398, %v2398
    %v2463 = vpack.c.bf16 %v2399, %v2399
    %v2464 = vpack.c.bf16 %v2400, %v2400
    %v2465 = vpack.c.bf16 %v2401, %v2401
    %v2466 = vpack.c.bf16 %v2402, %v2402
    %v2467 = vpack.c.bf16 %v2403, %v2403
    %v2468 = vpack.c.bf16 %v2404, %v2404
    %v2469 = vpack.c.bf16 %v2405, %v2405
    %v2470 = vpack.c.bf16 %v2406, %v2406
    %v2471 = vpack.c.bf16 %v2407, %v2407
    %v2472 = vpack.c.bf16 %v2408, %v2408
    %v2473 = vpack.c.bf16 %v2409, %v2409
    %v2474 = vpack.c.bf16 %v2410, %v2410
    %v2475 = vpack.c.bf16 %v2411, %v2411
    %v2476 = vpack.c.bf16 %v2412, %v2412
    %v2477 = vpack.c.bf16 %v2413, %v2413
    %v2478 = vpack.c.bf16 %v2414, %v2414
    %v2479 = vpack.c.bf16 %v2415, %v2415
    %v2480 = vpack.c.bf16 %v2416, %v2416
    %v2481 = vpack.c.bf16 %v2417, %v2417
    %v2482 = vpack.c.bf16 %v2418, %v2418
    %v2483 = vpack.c.bf16 %v2419, %v2419
    %v2484 = vpack.c.bf16 %v2420, %v2420
    %v2485 = vpack.c.bf16 %v2421, %v2421
    %v2486 = vpack.c.bf16 %v2422, %v2422
    %v2487 = vpack.c.bf16 %v2423, %v2423
    %v2488 = vpack.c.bf16 %v2424, %v2424
    %v2489 = vpack.c.bf16 %v2425, %v2425
    %v2490 = vpack.c.bf16 %v2426, %v2426
    %v2491 = vpack.c.bf16 %v2427, %v2427
    %v2492 = vpack.c.bf16 %v2428, %v2428
    %v2493 = vpack.c.bf16 %v2429, %v2429
    %v2494 = vpack.c.bf16 %v2430, %v2430
    %v2495 = vpack.c.bf16 %v2431, %v2431
    %v2496 = vpack.c.bf16 %v2432, %v2432
    %v2497 = vpack.c.bf16 %v2433, %v2433
    %v2498 = vpack.c.bf16 %v2434, %v2434
    %v2499 = vpack.c.bf16 %v2435, %v2435
    %v2500 = vpack.c.bf16 %v2436, %v2436
    %v2501 = vpack.c.bf16 %v2437, %v2437
    %v2502 = vpack.c.bf16 %v2438, %v2438
    %v2503 = vpack.c.bf16 %v2439, %v2439
    %2504 = vst [vmem:[#allocation5] sm:$0xf] %v2440
    %2505 = vst [vmem:[#allocation5 + $0x4] sm:$0xf] %v2441
    %2506 = vst [vmem:[#allocation5 + $0x8] sm:$0xf] %v2442
    %2507 = vst [vmem:[#allocation5 + $0xc] sm:$0xf] %v2443
    %2508 = vst [vmem:[#allocation5 + $0x10] sm:$0xf] %v2444
    %2509 = vst [vmem:[#allocation5 + $0x14] sm:$0xf] %v2445
    %2510 = vst [vmem:[#allocation5 + $0x18] sm:$0xf] %v2446
    %2511 = vst [vmem:[#allocation5 + $0x1c] sm:$0xf] %v2447
    %2512 = vst [vmem:[#allocation5 + $0x20] sm:$0xf] %v2448
    %2513 = vst [vmem:[#allocation5 + $0x24] sm:$0xf] %v2449
    %2514 = vst [vmem:[#allocation5 + $0x28] sm:$0xf] %v2450
    %2515 = vst [vmem:[#allocation5 + $0x2c] sm:$0xf] %v2451
    %2516 = vst [vmem:[#allocation5 + $0x30] sm:$0xf] %v2452
    %2517 = vst [vmem:[#allocation5 + $0x34] sm:$0xf] %v2453
    %2518 = vst [vmem:[#allocation5 + $0x38] sm:$0xf] %v2454
    %2519 = vst [vmem:[#allocation5 + $0x3c] sm:$0xf] %v2455
    %2520 = vst [vmem:[#allocation5 + $0x40] sm:$0xf] %v2456
    %2521 = vst [vmem:[#allocation5 + $0x44] sm:$0xf] %v2457
    %2522 = vst [vmem:[#allocation5 + $0x48] sm:$0xf] %v2458
    %2523 = vst [vmem:[#allocation5 + $0x4c] sm:$0xf] %v2459
    %2524 = vst [vmem:[#allocation5 + $0x50] sm:$0xf] %v2460
    %2525 = vst [vmem:[#allocation5 + $0x54] sm:$0xf] %v2461
    %2526 = vst [vmem:[#allocation5 + $0x58] sm:$0xf] %v2462
    %2527 = vst [vmem:[#allocation5 + $0x5c] sm:$0xf] %v2463
    %2528 = vst [vmem:[#allocation5 + $0x60] sm:$0xf] %v2464
    %2529 = vst [vmem:[#allocation5 + $0x64] sm:$0xf] %v2465
    %2530 = vst [vmem:[#allocation5 + $0x68] sm:$0xf] %v2466
    %2531 = vst [vmem:[#allocation5 + $0x6c] sm:$0xf] %v2467
    %2532 = vst [vmem:[#allocation5 + $0x70] sm:$0xf] %v2468
    %2533 = vst [vmem:[#allocation5 + $0x74] sm:$0xf] %v2469
    %2534 = vst [vmem:[#allocation5 + $0x78] sm:$0xf] %v2470
    %2535 = vst [vmem:[#allocation5 + $0x7c] sm:$0xf] %v2471
    %2536 = vst [vmem:[#allocation5 + $0x80] sm:$0xf] %v2472
    %2537 = vst [vmem:[#allocation5 + $0x84] sm:$0xf] %v2473
    %2538 = vst [vmem:[#allocation5 + $0x88] sm:$0xf] %v2474
    %2539 = vst [vmem:[#allocation5 + $0x8c] sm:$0xf] %v2475
    %2540 = vst [vmem:[#allocation5 + $0x90] sm:$0xf] %v2476
    %2541 = vst [vmem:[#allocation5 + $0x94] sm:$0xf] %v2477
    %2542 = vst [vmem:[#allocation5 + $0x98] sm:$0xf] %v2478
    %2543 = vst [vmem:[#allocation5 + $0x9c] sm:$0xf] %v2479
    %2544 = vst [vmem:[#allocation5 + $0xa0] sm:$0xf] %v2480
    %2545 = vst [vmem:[#allocation5 + $0xa4] sm:$0xf] %v2481
    %2546 = vst [vmem:[#allocation5 + $0xa8] sm:$0xf] %v2482
    %2547 = vst [vmem:[#allocation5 + $0xac] sm:$0xf] %v2483
    %2548 = vst [vmem:[#allocation5 + $0xb0] sm:$0xf] %v2484
    %2549 = vst [vmem:[#allocation5 + $0xb4] sm:$0xf] %v2485
    %2550 = vst [vmem:[#allocation5 + $0xb8] sm:$0xf] %v2486
    %2551 = vst [vmem:[#allocation5 + $0xbc] sm:$0xf] %v2487
    %2552 = vst [vmem:[#allocation5 + $0xc0] sm:$0xf] %v2488
    %2553 = vst [vmem:[#allocation5 + $0xc4] sm:$0xf] %v2489
    %2554 = vst [vmem:[#allocation5 + $0xc8] sm:$0xf] %v2490
    %2555 = vst [vmem:[#allocation5 + $0xcc] sm:$0xf] %v2491
    %2556 = vst [vmem:[#allocation5 + $0xd0] sm:$0xf] %v2492
    %2557 = vst [vmem:[#allocation5 + $0xd4] sm:$0xf] %v2493
    %2558 = vst [vmem:[#allocation5 + $0xd8] sm:$0xf] %v2494
    %2559 = vst [vmem:[#allocation5 + $0xdc] sm:$0xf] %v2495
    %2560 = vst [vmem:[#allocation5 + $0xe0] sm:$0xf] %v2496
    %2561 = vst [vmem:[#allocation5 + $0xe4] sm:$0xf] %v2497
    %2562 = vst [vmem:[#allocation5 + $0xe8] sm:$0xf] %v2498
    %2563 = vst [vmem:[#allocation5 + $0xec] sm:$0xf] %v2499
    %2564 = vst [vmem:[#allocation5 + $0xf0] sm:$0xf] %v2500
    %2565 = vst [vmem:[#allocation5 + $0xf4] sm:$0xf] %v2501
    %2566 = vst [vmem:[#allocation5 + $0xf8] sm:$0xf] %v2502
    %2567 = vst [vmem:[#allocation5 + $0xfc] sm:$0xf] %v2503
    // Predicated region
    $region42: #{tpu_custom_call.1} parent=1 // pred_check
      _
    $region43: #{tpu_custom_call.1} parent=1 // pred_check_branch
      %2569 = sbr.rel (0) target = $region45
    $region44: #{tpu_custom_call.1} parent=1 // pred_region
      %2571 = vsyncadd [#allocation4], 0
      %s2572 = sshll.u32 [#allocation5], 4
      %s2573 = int_to_ptr.vmem [resolvable:$true] %s2572
      %s2574 = sshll.u32 %s9, 4
      %s2575 = int_to_ptr.hbm [resolvable:$true] %s2574
      %2580 = dma.vmem_to_hbm [thread:$0]  %s2573, 4096, %s2575, [#allocation4], 64, 64, 4
    $region45: #{tpu_custom_call.1} parent=1 // pred_fallthru
      _
    // Predicated region
    $region46: #{tpu_custom_call.1} parent=1 // pred_check
      _
    $region47: #{tpu_custom_call.1} parent=1 // pred_check_branch
      %2582 = sbr.rel (0) target = $region49
    $region48: #{tpu_custom_call.1} parent=1 // pred_region
      %2584 = dma.done [#allocation4], 4096
    $region49: #{tpu_custom_call.1} parent=1 // pred_fallthru
      _
    %2585 = vsyncpa [#allocation3], 1
    %2586 = vsyncpa [#allocation4], 1

</llo_original>
